<compile_context>
chip_gen: v7x
topology: tpu7x:2x2x1
jax: 0.10.0
libtpu: 0.0.40
codegen_flags: <defaults>
</compile_context>

<pallas_src>
import functools

import jax
import jax.numpy as jnp
import numpy as np
from jax.experimental import pallas as pl
from jax.experimental.pallas import tpu as pltpu

_BN_EPS = 1e-5
_LEAKY_SLOPE = 0.01   # PyTorch nn.LeakyReLU default
_LANE = 128
_SUBLANE_BF16 = 16    # bf16 vregs pack (16, 128); keep batch tiles 16-row aligned


def _round_up(n, m):
    return (n + m - 1) // m * m


def _leaky_relu(h):
    # slope < 1  =>  max(h, slope*h) == LeakyReLU(h); single VPU select.
    return jnp.maximum(h, _LEAKY_SLOPE * h)


# -----------------------------------------------------------------------------
# Kernel
# -----------------------------------------------------------------------------
def vae_fwd_kernel(
    x_ref,       # (Bt, D)     f32   raw input (true width, no lane padding)
    eps_ref,     # (Bt, L)     f32   reparameterization noise (true width)
    w_in_ref,    # (D, P)      f32   encoder L1 (BN1 folded; f32 for fold accuracy)
    wsq_ref,     # (3, P, P)   bf16  [enc L2 (BN2 folded), enc L3, dec L2]
    w_z_ref,     # (L, P)      bf16  dec L1
    whead_ref,   # (2, P, L)   bf16  [W_mu, W_logvar]
    w_out_ref,   # (P, Dp)     bf16  dec L3
    bP_ref,      # (5, 1, P)   f32   [b1, b2, b3, bd1, bd2]
    bhead_ref,   # (2, 1, L)   f32   [b_mu, b_logvar]
    bout_ref,    # (1, Dp)     f32
    rec_ref,     # (Bt, Dp)    out   reconstruction (lane-dense)
    mu_ref,      # (Bt, L)     out
    logvar_ref,  # (Bt, L)     out
    *,
    compute_dtype,
):
    cdt = compute_dtype

    def mm(a, w):
        return jnp.dot(a.astype(cdt), w, preferred_element_type=jnp.float32)

    # ---- encoder (BN1/BN2 folded into the linears, Dropout = identity in eval) ----
    h = jnp.dot(x_ref[...], w_in_ref[...], preferred_element_type=jnp.float32)
    h = _leaky_relu(h + bP_ref[0])
    h = _leaky_relu(mm(h, wsq_ref[0]) + bP_ref[1])
    h = mm(h, wsq_ref[1]) + bP_ref[2]

    # ---- latent heads (two narrow matmuls; everything stays lane-aligned) ----
    mu = mm(h, whead_ref[0]) + bhead_ref[0]
    logvar = mm(h, whead_ref[1]) + bhead_ref[1]

    # ---- reparameterize: z = mu + eps * exp(0.5*logvar) (exp on the EUP slot) ----
    z = mu + eps_ref[...] * jnp.exp(0.5 * logvar)

    # ---- decoder (Dropout = identity in eval) ----
    d = _leaky_relu(mm(z, w_z_ref[...]) + bP_ref[3])
    d = _leaky_relu(mm(d, wsq_ref[2]) + bP_ref[4])
    rec = mm(d, w_out_ref[...]) + bout_ref[...]

    rec_ref[...] = rec.astype(rec_ref.dtype)
    mu_ref[...] = mu.astype(mu_ref.dtype)
    logvar_ref[...] = logvar.astype(logvar_ref.dtype)


# -----------------------------------------------------------------------------
# Parameter construction / packing
# -----------------------------------------------------------------------------
def init_raw_params(key, num_dofs, latent_dim, hidden_dim):
    """Synthetic parameters mirroring the PyTorch module (weights stored (in, out))."""
    ks = jax.random.split(key, 10)
    scale = 0.05

    def lin(k, fan_in, fan_out):
        kw, kb = jax.random.split(k)
        w = scale * jax.random.normal(kw, (fan_in, fan_out), jnp.float32)
        b = scale * jax.random.normal(kb, (fan_out,), jnp.float32)
        return w, b

    def bn(k, feat):
        kg, kb, km, kv = jax.random.split(k, 4)
        gamma = 1.0 + 0.1 * jax.random.normal(kg, (feat,), jnp.float32)
        beta = 0.1 * jax.random.normal(kb, (feat,), jnp.float32)
        running_mean = 0.1 * jax.random.normal(km, (feat,), jnp.float32)
        running_var = 1.0 + 0.2 * jax.random.uniform(kv, (feat,), jnp.float32)
        return gamma, beta, running_mean, running_var

    p = {}
    p["bn1"] = bn(ks[0], num_dofs)
    p["l1"] = lin(ks[1], num_dofs, hidden_dim)
    p["bn2"] = bn(ks[2], hidden_dim)
    p["l2"] = lin(ks[3], hidden_dim, hidden_dim)
    p["l3"] = lin(ks[4], hidden_dim, hidden_dim)
    p["mu"] = lin(ks[5], hidden_dim, latent_dim)
    p["lv"] = lin(ks[6], hidden_dim, latent_dim)
    p["d1"] = lin(ks[7], latent_dim, hidden_dim)
    p["d2"] = lin(ks[8], hidden_dim, hidden_dim)
    p["d3"] = lin(ks[9], hidden_dim, num_dofs)
    return p


def pack_params(raw, num_dofs, latent_dim, hidden_dim, weight_dtype=jnp.bfloat16):
    """Fold BN into the adjacent linears and pack/pad weights for the kernel."""
    # v6e/v7x MXU tiles are 256 wide; align the hidden width to 256 once it
    # exceeds one 128-lane tile (no-op for hidden_dim <= 128 or multiples of 256).
    h_align = 256 if hidden_dim > _LANE else _LANE
    P = _round_up(hidden_dim, h_align)
    Dp = _round_up(num_dofs, _LANE)
    L = latent_dim

    def fold_bn(bnp, linp):
        g, b, m, v = bnp
        w, bias = linp
        s = g * jax.lax.rsqrt(v + _BN_EPS)          # (in,)
        t = b - m * s                               # (in,)
        return w * s[:, None], bias + t @ w         # W' = diag(s)@W, b' = b + t@W

    def pad_w(w, rows, cols):
        return jnp.zeros((rows, cols), jnp.float32).at[: w.shape[0], : w.shape[1]].set(w)

    def pad_b(b, cols):
        return jnp.zeros((1, cols), jnp.float32).at[0, : b.shape[0]].set(b)

    w1, b1 = fold_bn(raw["bn1"], raw["l1"])
    w2, b2 = fold_bn(raw["bn2"], raw["l2"])
    w3, b3 = raw["l3"]
    wd1, bd1 = raw["d1"]
    wd2, bd2 = raw["d2"]
    wd3, bd3 = raw["d3"]
    wmu, bmu = raw["mu"]
    wlv, blv = raw["lv"]

    packed = {
        # BN1-folded encoder L1 kept in f32: the fold can amplify bf16 rounding
        # when running_var is small, and this weight is tiny (D x P).
        "w_in": pad_w(w1, num_dofs, P).astype(jnp.float32),
        "wsq": jnp.stack(
            [pad_w(w2, P, P), pad_w(w3, P, P), pad_w(wd2, P, P)]
        ).astype(weight_dtype),                                           # (3, P, P)
        "w_z": pad_w(wd1, latent_dim, P).astype(weight_dtype),            # (L, P)
        "whead": jnp.stack(
            [pad_w(wmu, P, L), pad_w(wlv, P, L)]
        ).astype(weight_dtype),                                           # (2, P, L)
        "w_out": pad_w(wd3, P, Dp).astype(weight_dtype),                  # (P, Dp)
        "bP": jnp.stack(
            [pad_b(b1, P), pad_b(b2, P), pad_b(b3, P), pad_b(bd1, P), pad_b(bd2, P)]
        ),                                                                # (5, 1, P) f32
        "bhead": jnp.stack([bmu.reshape(1, L), blv.reshape(1, L)]),       # (2, 1, L) f32
        "bout": pad_b(bd3, Dp),                                           # (1, Dp)  f32
        "P": int(P),
        "Dp": int(Dp),
        "num_dofs": int(num_dofs),
        "latent_dim": int(latent_dim),
    }
    return packed


# -----------------------------------------------------------------------------
# Tiling / wrapper
# -----------------------------------------------------------------------------
def _choose_tiling(batch, d, l, dp, p, act_budget_bytes=24 << 20):
    """Pick the batch tile from a VMEM budget; prefer >=2 grid steps (v7x megacore)."""
    row_bytes = (
        2 * 4 * (d + l)          # x + eps tiles (f32, double buffered)
        + 2 * 4 * (dp + 2 * l)   # rec + mu + logvar tiles (double buffered)
        + 8 * 4 * p              # live f32 intermediates / spill headroom
    )
    max_tile = (act_budget_bytes // row_bytes) // _SUBLANE_BF16 * _SUBLANE_BF16
    max_tile = int(min(max(max_tile, _SUBLANE_BF16), 2048))

    b16 = _round_up(batch, _SUBLANE_BF16)
    n_steps = -(-b16 // max_tile)
    if n_steps == 1 and b16 >= 2 * _SUBLANE_BF16:
        n_steps = 2              # let v7x's second TensorCore share the batch
    b_tile = _round_up(-(-b16 // n_steps), _SUBLANE_BF16)
    return b_tile, n_steps


def biomech_prior_vae_forward(x, eps, packed, *, b_tile=None, out_dtype=jnp.float32):
    """Full VAE forward in one Pallas call; batch tiled by a parallel 1-D grid."""
    B, D = x.shape
    L = packed["latent_dim"]
    P, Dp = packed["P"], packed["Dp"]
    assert D == packed["num_dofs"]
    assert eps.shape == (B, L)

    if b_tile is None:
        b_tile, n_steps = _choose_tiling(B, D, L, Dp, P)
    else:
        b_tile = _round_up(int(b_tile), _SUBLANE_BF16)
        n_steps = -(-_round_up(B, _SUBLANE_BF16) // b_tile)
    B_pad = b_tile * n_steps

    x_p = x.astype(jnp.float32)
    eps_p = eps.astype(jnp.float32)
    if B_pad != B:
        # Row-pad only (zero rows are exact through the network and are sliced off
        # below); feature dims are NOT padded -- the kernel consumes the true widths.
        x_p = jnp.zeros((B_pad, D), jnp.float32).at[:B].set(x_p)
        eps_p = jnp.zeros((B_pad, L), jnp.float32).at[:B].set(eps_p)

    weights = (
        packed["w_in"], packed["wsq"], packed["w_z"], packed["whead"],
        packed["w_out"], packed["bP"], packed["bhead"], packed["bout"],
    )
    weight_bytes = sum(int(np.prod(w.shape)) * np.dtype(w.dtype).itemsize for w in weights)

    out_isize = np.dtype(out_dtype).itemsize
    act_bytes = b_tile * (2 * 4 * (D + L) + 2 * out_isize * (Dp + 2 * L) + 8 * 4 * P)
    vmem_limit = int(min(max(act_bytes + 2 * weight_bytes + (4 << 20), 16 << 20), 64 << 20))

    kernel = functools.partial(vae_fwd_kernel, compute_dtype=packed["wsq"].dtype)

    flops = 2 * B_pad * (D * P + 3 * P * P + 2 * P * L + L * P + P * Dp)
    cost = pl.CostEstimate(
        flops=int(flops),
        transcendentals=int(B_pad * L),
        bytes_accessed=int(
            4 * B_pad * (D + L) + weight_bytes + out_isize * B_pad * (Dp + 2 * L)
        ),
    )

    def _resident_spec(shape, single_buffered):
        index_map = (lambda i: (0, 0)) if len(shape) == 2 else (lambda i: (0, 0, 0))
        if single_buffered:
            # Constant-index weights are fetched once; one VMEM buffer is enough
            # and halves their footprint (matters on v7x's 64 MiB once hidden grows).
            return pl.BlockSpec(shape, index_map, pipeline_mode=pl.Buffered(1))
        return pl.BlockSpec(shape, index_map)

    def _run(single_buffered_weights):
        grid_spec = pltpu.PrefetchScalarGridSpec(
            num_scalar_prefetch=0,
            grid=(n_steps,),
            in_specs=[
                pl.BlockSpec((b_tile, D), lambda i: (i, 0)),    # x tile
                pl.BlockSpec((b_tile, L), lambda i: (i, 0)),    # eps tile
            ] + [_resident_spec(w.shape, single_buffered_weights) for w in weights],
            out_specs=[
                pl.BlockSpec((b_tile, Dp), lambda i: (i, 0)),   # rec
                pl.BlockSpec((b_tile, L), lambda i: (i, 0)),    # mu
                pl.BlockSpec((b_tile, L), lambda i: (i, 0)),    # logvar
            ],
        )
        return pl.pallas_call(
            kernel,
            out_shape=(
                jax.ShapeDtypeStruct((B_pad, Dp), out_dtype),
                jax.ShapeDtypeStruct((B_pad, L), out_dtype),
                jax.ShapeDtypeStruct((B_pad, L), out_dtype),
            ),
            grid_spec=grid_spec,
            compiler_params=pltpu.CompilerParams(
                dimension_semantics=("parallel",),
                vmem_limit_bytes=vmem_limit,
            ),
            cost_estimate=cost,
        )(x_p, eps_p, *weights)

    try:
        rec_p, mu_p, logvar_p = _run(True)
    except Exception:
        # TODO(synk): this jax build rejected pipeline_mode=pl.Buffered(1) on the
        # resident weight specs; fall back to default (double-buffered) specs.
        rec_p, mu_p, logvar_p = _run(False)

    rec = rec_p[:B, :D]
    mu = mu_p[:B]
    logvar = logvar_p[:B]
    return rec, mu, logvar


# -----------------------------------------------------------------------------
# Pure-JAX reference (unfolded, f32) for correctness checking
# -----------------------------------------------------------------------------
def reference_forward(x, eps, raw):
    def bn(h, p):
        g, b, m, v = p
        return (h - m) * jax.lax.rsqrt(v + _BN_EPS) * g + b

    def lin(h, p):
        w, b = p
        return h @ w + b

    def lrelu(h):
        return jnp.where(h > 0, h, _LEAKY_SLOPE * h)

    h = bn(x, raw["bn1"])
    h = lrelu(lin(h, raw["l1"]))
    h = bn(h, raw["bn2"])
    h = lrelu(lin(h, raw["l2"]))          # Dropout -> identity (eval)
    h = lin(h, raw["l3"])
    mu = lin(h, raw["mu"])
    logvar = lin(h, raw["lv"])
    z = mu + eps * jnp.exp(0.5 * logvar)
    d = lrelu(lin(z, raw["d1"]))
    d = lrelu(lin(d, raw["d2"]))          # Dropout -> identity (eval)
    rec = lin(d, raw["d3"])
    return rec, mu, logvar


if __name__ == "__main__":
    # Small, deterministic problem sizes consistent with the module's forward.
    batch = 8
    num_dofs = 16
    latent_dim = 16
    hidden_dim = 64

    root = jax.random.PRNGKey(0)
    k_params, k_x, k_eps = jax.random.split(root, 3)

    raw = init_raw_params(k_params, num_dofs, latent_dim, hidden_dim)
    packed = pack_params(raw, num_dofs, latent_dim, hidden_dim)

    x = jax.random.normal(k_x, (batch, num_dofs), jnp.float32)
    eps = jax.random.normal(k_eps, (batch, latent_dim), jnp.float32)

    rec, mu, logvar = biomech_prior_vae_forward(x, eps, packed)
    jax.block_until_ready((rec, mu, logvar))

    assert rec.shape == (batch, num_dofs)
    assert mu.shape == (batch, latent_dim)
    assert logvar.shape == (batch, latent_dim)

    # Check against the unfolded f32 reference (tolerances cover bf16 matmuls).
    rec_r, mu_r, lv_r = reference_forward(x, eps, raw)
    np.testing.assert_allclose(np.asarray(rec), np.asarray(rec_r), atol=3e-2, rtol=3e-2)
    np.testing.assert_allclose(np.asarray(mu), np.asarray(mu_r), atol=3e-2, rtol=3e-2)
    np.testing.assert_allclose(np.asarray(logvar), np.asarray(lv_r), atol=3e-2, rtol=3e-2)

    print("KERNEL_OK")
</pallas_src>

<mosaic_0001>
module attributes {stable_mosaic.version = 11 : i64} {
  func.func @vae_fwd_kernel(%arg0: i32, %arg1: memref<16x16xf32, #tpu.memory_space<vmem>>, %arg2: memref<16x16xf32, #tpu.memory_space<vmem>>, %arg3: memref<16x128xf32, #tpu.memory_space<vmem>>, %arg4: memref<3x128x128xbf16, #tpu.memory_space<vmem>>, %arg5: memref<16x128xbf16, #tpu.memory_space<vmem>>, %arg6: memref<2x128x16xbf16, #tpu.memory_space<vmem>>, %arg7: memref<128x128xbf16, #tpu.memory_space<vmem>>, %arg8: memref<5x1x128xf32, #tpu.memory_space<vmem>>, %arg9: memref<2x1x16xf32, #tpu.memory_space<vmem>>, %arg10: memref<1x128xf32, #tpu.memory_space<vmem>>, %arg11: memref<16x128xf32, #tpu.memory_space<vmem>>, %arg12: memref<16x16xf32, #tpu.memory_space<vmem>>, %arg13: memref<16x16xf32, #tpu.memory_space<vmem>>) attributes {dimension_semantics = [#tpu.dimension_semantics<parallel>], iteration_bounds = array<i64: 1>, scalar_prefetch = 0 : i64, scratch_operands = 0 : i64, tpu.core_type = #tpu.core_type<tc>, window_params = [{transform_indices = @transform_0, window_bounds = array<i64: 16, 16>}, {transform_indices = @transform_1, window_bounds = array<i64: 16, 16>}, {pipeline_mode = #tpu.pipeline_mode<synchronous>, transform_indices = @transform_2, window_bounds = array<i64: 16, 128>}, {pipeline_mode = #tpu.pipeline_mode<synchronous>, transform_indices = @transform_3, window_bounds = array<i64: 3, 128, 128>}, {pipeline_mode = #tpu.pipeline_mode<synchronous>, transform_indices = @transform_4, window_bounds = array<i64: 16, 128>}, {pipeline_mode = #tpu.pipeline_mode<synchronous>, transform_indices = @transform_5, window_bounds = array<i64: 2, 128, 16>}, {pipeline_mode = #tpu.pipeline_mode<synchronous>, transform_indices = @transform_6, window_bounds = array<i64: 128, 128>}, {pipeline_mode = #tpu.pipeline_mode<synchronous>, transform_indices = @transform_7, window_bounds = array<i64: 5, 1, 128>}, {pipeline_mode = #tpu.pipeline_mode<synchronous>, transform_indices = @transform_8, window_bounds = array<i64: 2, 1, 16>}, {pipeline_mode = #tpu.pipeline_mode<synchronous>, transform_indices = @transform_9, window_bounds = array<i64: 1, 128>}, {transform_indices = @transform_10, window_bounds = array<i64: 16, 128>}, {transform_indices = @transform_11, window_bounds = array<i64: 16, 16>}, {transform_indices = @transform_12, window_bounds = array<i64: 16, 16>}]} {
    %c0 = arith.constant 0 : index
    %c0_0 = arith.constant 0 : index
    %0 = vector.load %arg1[%c0, %c0_0] : memref<16x16xf32, #tpu.memory_space<vmem>>, vector<16x16xf32>
    %c0_1 = arith.constant 0 : index
    %c0_2 = arith.constant 0 : index
    %1 = vector.load %arg3[%c0_1, %c0_2] : memref<16x128xf32, #tpu.memory_space<vmem>>, vector<16x128xf32>
    %cst = arith.constant dense<0.000000e+00> : vector<16x128xf32>
    %2 = tpu.matmul %0, %1, %cst {dimension_numbers = #tpu.dot_dimension_numbers<[1], [0], [0], [1], [0, 0, 1, 1], [], []>} : vector<16x16xf32>, vector<16x128xf32>, vector<16x128xf32> -> vector<16x128xf32>
    %c0_3 = arith.constant 0 : index
    %c0_4 = arith.constant 0 : index
    %c0_5 = arith.constant 0 : index
    %3 = vector.load %arg8[%c0_3, %c0_4, %c0_5] : memref<5x1x128xf32, #tpu.memory_space<vmem>>, vector<1x1x128xf32>
    %4 = vector.shape_cast %3 : vector<1x1x128xf32> to vector<1x128xf32>
    %5 = vector.broadcast %4 : vector<1x128xf32> to vector<16x128xf32>
    %6 = arith.addf %2, %5 : vector<16x128xf32>
    %cst_6 = arith.constant 0.00999999977 : f32
    %7 = vector.broadcast %cst_6 : f32 to vector<16x128xf32>
    %8 = arith.mulf %7, %6 : vector<16x128xf32>
    %9 = arith.maximumf %6, %8 : vector<16x128xf32>
    %c0_7 = arith.constant 0 : index
    %c0_8 = arith.constant 0 : index
    %c0_9 = arith.constant 0 : index
    %10 = vector.load %arg4[%c0_7, %c0_8, %c0_9] : memref<3x128x128xbf16, #tpu.memory_space<vmem>>, vector<1x128x128xbf16>
    %11 = vector.shape_cast %10 : vector<1x128x128xbf16> to vector<128x128xbf16>
    %12 = arith.truncf %9 : vector<16x128xf32> to vector<16x128xbf16>
    %cst_10 = arith.constant dense<0.000000e+00> : vector<16x128xf32>
    %13 = tpu.matmul %12, %11, %cst_10 {dimension_numbers = #tpu.dot_dimension_numbers<[1], [0], [0], [1], [0, 0, 1, 1], [], []>} : vector<16x128xbf16>, vector<128x128xbf16>, vector<16x128xf32> -> vector<16x128xf32>
    %c1 = arith.constant 1 : index
    %c0_11 = arith.constant 0 : index
    %c0_12 = arith.constant 0 : index
    %14 = vector.load %arg8[%c1, %c0_11, %c0_12] : memref<5x1x128xf32, #tpu.memory_space<vmem>>, vector<1x1x128xf32>
    %15 = vector.shape_cast %14 : vector<1x1x128xf32> to vector<1x128xf32>
    %16 = vector.broadcast %15 : vector<1x128xf32> to vector<16x128xf32>
    %17 = arith.addf %13, %16 : vector<16x128xf32>
    %cst_13 = arith.constant 0.00999999977 : f32
    %18 = vector.broadcast %cst_13 : f32 to vector<16x128xf32>
    %19 = arith.mulf %18, %17 : vector<16x128xf32>
    %20 = arith.maximumf %17, %19 : vector<16x128xf32>
    %c1_14 = arith.constant 1 : index
    %c0_15 = arith.constant 0 : index
    %c0_16 = arith.constant 0 : index
    %21 = vector.load %arg4[%c1_14, %c0_15, %c0_16] : memref<3x128x128xbf16, #tpu.memory_space<vmem>>, vector<1x128x128xbf16>
    %22 = vector.shape_cast %21 : vector<1x128x128xbf16> to vector<128x128xbf16>
    %23 = arith.truncf %20 : vector<16x128xf32> to vector<16x128xbf16>
    %cst_17 = arith.constant dense<0.000000e+00> : vector<16x128xf32>
    %24 = tpu.matmul %23, %22, %cst_17 {dimension_numbers = #tpu.dot_dimension_numbers<[1], [0], [0], [1], [0, 0, 1, 1], [], []>} : vector<16x128xbf16>, vector<128x128xbf16>, vector<16x128xf32> -> vector<16x128xf32>
    %c2 = arith.constant 2 : index
    %c0_18 = arith.constant 0 : index
    %c0_19 = arith.constant 0 : index
    %25 = vector.load %arg8[%c2, %c0_18, %c0_19] : memref<5x1x128xf32, #tpu.memory_space<vmem>>, vector<1x1x128xf32>
    %26 = vector.shape_cast %25 : vector<1x1x128xf32> to vector<1x128xf32>
    %27 = vector.broadcast %26 : vector<1x128xf32> to vector<16x128xf32>
    %28 = arith.addf %24, %27 : vector<16x128xf32>
    %c0_20 = arith.constant 0 : index
    %c0_21 = arith.constant 0 : index
    %c0_22 = arith.constant 0 : index
    %29 = vector.load %arg6[%c0_20, %c0_21, %c0_22] : memref<2x128x16xbf16, #tpu.memory_space<vmem>>, vector<1x128x16xbf16>
    %30 = vector.shape_cast %29 : vector<1x128x16xbf16> to vector<128x16xbf16>
    %31 = arith.truncf %28 : vector<16x128xf32> to vector<16x128xbf16>
    %cst_23 = arith.constant dense<0.000000e+00> : vector<16x16xf32>
    %32 = tpu.matmul %31, %30, %cst_23 {dimension_numbers = #tpu.dot_dimension_numbers<[1], [0], [0], [1], [0, 0, 1, 1], [], []>} : vector<16x128xbf16>, vector<128x16xbf16>, vector<16x16xf32> -> vector<16x16xf32>
    %c0_24 = arith.constant 0 : index
    %c0_25 = arith.constant 0 : index
    %c0_26 = arith.constant 0 : index
    %33 = vector.load %arg9[%c0_24, %c0_25, %c0_26] : memref<2x1x16xf32, #tpu.memory_space<vmem>>, vector<1x1x16xf32>
    %34 = vector.shape_cast %33 : vector<1x1x16xf32> to vector<1x16xf32>
    %35 = vector.broadcast %34 : vector<1x16xf32> to vector<16x16xf32>
    %36 = arith.addf %32, %35 : vector<16x16xf32>
    %c1_27 = arith.constant 1 : index
    %c0_28 = arith.constant 0 : index
    %c0_29 = arith.constant 0 : index
    %37 = vector.load %arg6[%c1_27, %c0_28, %c0_29] : memref<2x128x16xbf16, #tpu.memory_space<vmem>>, vector<1x128x16xbf16>
    %38 = vector.shape_cast %37 : vector<1x128x16xbf16> to vector<128x16xbf16>
    %39 = arith.truncf %28 : vector<16x128xf32> to vector<16x128xbf16>
    %cst_30 = arith.constant dense<0.000000e+00> : vector<16x16xf32>
    %40 = tpu.matmul %39, %38, %cst_30 {dimension_numbers = #tpu.dot_dimension_numbers<[1], [0], [0], [1], [0, 0, 1, 1], [], []>} : vector<16x128xbf16>, vector<128x16xbf16>, vector<16x16xf32> -> vector<16x16xf32>
    %c1_31 = arith.constant 1 : index
    %c0_32 = arith.constant 0 : index
    %c0_33 = arith.constant 0 : index
    %41 = vector.load %arg9[%c1_31, %c0_32, %c0_33] : memref<2x1x16xf32, #tpu.memory_space<vmem>>, vector<1x1x16xf32>
    %42 = vector.shape_cast %41 : vector<1x1x16xf32> to vector<1x16xf32>
    %43 = vector.broadcast %42 : vector<1x16xf32> to vector<16x16xf32>
    %44 = arith.addf %40, %43 : vector<16x16xf32>
    %c0_34 = arith.constant 0 : index
    %c0_35 = arith.constant 0 : index
    %45 = vector.load %arg2[%c0_34, %c0_35] : memref<16x16xf32, #tpu.memory_space<vmem>>, vector<16x16xf32>
    %cst_36 = arith.constant 5.000000e-01 : f32
    %46 = vector.broadcast %cst_36 : f32 to vector<16x16xf32>
    %47 = arith.mulf %46, %44 : vector<16x16xf32>
    %48 = math.exp %47 : vector<16x16xf32>
    %49 = arith.mulf %45, %48 : vector<16x16xf32>
    %50 = arith.addf %36, %49 : vector<16x16xf32>
    %c0_37 = arith.constant 0 : index
    %c0_38 = arith.constant 0 : index
    %51 = vector.load %arg5[%c0_37, %c0_38] : memref<16x128xbf16, #tpu.memory_space<vmem>>, vector<16x128xbf16>
    %52 = arith.truncf %50 : vector<16x16xf32> to vector<16x16xbf16>
    %cst_39 = arith.constant dense<0.000000e+00> : vector<16x128xf32>
    %53 = tpu.matmul %52, %51, %cst_39 {dimension_numbers = #tpu.dot_dimension_numbers<[1], [0], [0], [1], [0, 0, 1, 1], [], []>} : vector<16x16xbf16>, vector<16x128xbf16>, vector<16x128xf32> -> vector<16x128xf32>
    %c3 = arith.constant 3 : index
    %c0_40 = arith.constant 0 : index
    %c0_41 = arith.constant 0 : index
    %54 = vector.load %arg8[%c3, %c0_40, %c0_41] : memref<5x1x128xf32, #tpu.memory_space<vmem>>, vector<1x1x128xf32>
    %55 = vector.shape_cast %54 : vector<1x1x128xf32> to vector<1x128xf32>
    %56 = vector.broadcast %55 : vector<1x128xf32> to vector<16x128xf32>
    %57 = arith.addf %53, %56 : vector<16x128xf32>
    %cst_42 = arith.constant 0.00999999977 : f32
    %58 = vector.broadcast %cst_42 : f32 to vector<16x128xf32>
    %59 = arith.mulf %58, %57 : vector<16x128xf32>
    %60 = arith.maximumf %57, %59 : vector<16x128xf32>
    %c2_43 = arith.constant 2 : index
    %c0_44 = arith.constant 0 : index
    %c0_45 = arith.constant 0 : index
    %61 = vector.load %arg4[%c2_43, %c0_44, %c0_45] : memref<3x128x128xbf16, #tpu.memory_space<vmem>>, vector<1x128x128xbf16>
    %62 = vector.shape_cast %61 : vector<1x128x128xbf16> to vector<128x128xbf16>
    %63 = arith.truncf %60 : vector<16x128xf32> to vector<16x128xbf16>
    %cst_46 = arith.constant dense<0.000000e+00> : vector<16x128xf32>
    %64 = tpu.matmul %63, %62, %cst_46 {dimension_numbers = #tpu.dot_dimension_numbers<[1], [0], [0], [1], [0, 0, 1, 1], [], []>} : vector<16x128xbf16>, vector<128x128xbf16>, vector<16x128xf32> -> vector<16x128xf32>
    %c4 = arith.constant 4 : index
    %c0_47 = arith.constant 0 : index
    %c0_48 = arith.constant 0 : index
    %65 = vector.load %arg8[%c4, %c0_47, %c0_48] : memref<5x1x128xf32, #tpu.memory_space<vmem>>, vector<1x1x128xf32>
    %66 = vector.shape_cast %65 : vector<1x1x128xf32> to vector<1x128xf32>
    %67 = vector.broadcast %66 : vector<1x128xf32> to vector<16x128xf32>
    %68 = arith.addf %64, %67 : vector<16x128xf32>
    %cst_49 = arith.constant 0.00999999977 : f32
    %69 = vector.broadcast %cst_49 : f32 to vector<16x128xf32>
    %70 = arith.mulf %69, %68 : vector<16x128xf32>
    %71 = arith.maximumf %68, %70 : vector<16x128xf32>
    %c0_50 = arith.constant 0 : index
    %c0_51 = arith.constant 0 : index
    %72 = vector.load %arg7[%c0_50, %c0_51] : memref<128x128xbf16, #tpu.memory_space<vmem>>, vector<128x128xbf16>
    %73 = arith.truncf %71 : vector<16x128xf32> to vector<16x128xbf16>
    %cst_52 = arith.constant dense<0.000000e+00> : vector<16x128xf32>
    %74 = tpu.matmul %73, %72, %cst_52 {dimension_numbers = #tpu.dot_dimension_numbers<[1], [0], [0], [1], [0, 0, 1, 1], [], []>} : vector<16x128xbf16>, vector<128x128xbf16>, vector<16x128xf32> -> vector<16x128xf32>
    %c0_53 = arith.constant 0 : index
    %c0_54 = arith.constant 0 : index
    %75 = vector.load %arg10[%c0_53, %c0_54] : memref<1x128xf32, #tpu.memory_space<vmem>>, vector<1x128xf32>
    %76 = vector.broadcast %75 : vector<1x128xf32> to vector<16x128xf32>
    %77 = arith.addf %74, %76 : vector<16x128xf32>
    %c0_55 = arith.constant 0 : index
    %c0_56 = arith.constant 0 : index
    %78 = vector.load %arg11[%c0_55, %c0_56] : memref<16x128xf32, #tpu.memory_space<vmem>>, vector<16x128xf32>
    tpu.vector_store %arg11[%c0_55, %c0_56], %77 {strides = array<i32>} : memref<16x128xf32, #tpu.memory_space<vmem>>, vector<16x128xf32>,
    %c0_57 = arith.constant 0 : index
    %c0_58 = arith.constant 0 : index
    %79 = vector.load %arg12[%c0_57, %c0_58] : memref<16x16xf32, #tpu.memory_space<vmem>>, vector<16x16xf32>
    tpu.vector_store %arg12[%c0_57, %c0_58], %36 {strides = array<i32>} : memref<16x16xf32, #tpu.memory_space<vmem>>, vector<16x16xf32>,
    %c0_59 = arith.constant 0 : index
    %c0_60 = arith.constant 0 : index
    %80 = vector.load %arg13[%c0_59, %c0_60] : memref<16x16xf32, #tpu.memory_space<vmem>>, vector<16x16xf32>
    tpu.vector_store %arg13[%c0_59, %c0_60], %44 {strides = array<i32>} : memref<16x16xf32, #tpu.memory_space<vmem>>, vector<16x16xf32>,
    return
  }
  func.func @transform_0(%arg0: i32) -> (i32, i32) {
    %c0_i32 = arith.constant 0 : i32
    %c0_i32_0 = arith.constant 0 : i32
    return %arg0, %c0_i32 : i32, i32
  }
  func.func @transform_1(%arg0: i32) -> (i32, i32) {
    %c0_i32 = arith.constant 0 : i32
    %c0_i32_0 = arith.constant 0 : i32
    return %arg0, %c0_i32 : i32, i32
  }
  func.func @transform_2(%arg0: i32) -> (i32, i32) {
    %c0_i32 = arith.constant 0 : i32
    %c0_i32_0 = arith.constant 0 : i32
    %c0_i32_1 = arith.constant 0 : i32
    return %c0_i32, %c0_i32_0 : i32, i32
  }
  func.func @transform_3(%arg0: i32) -> (i32, i32, i32) {
    %c0_i32 = arith.constant 0 : i32
    %c0_i32_0 = arith.constant 0 : i32
    %c0_i32_1 = arith.constant 0 : i32
    %c0_i32_2 = arith.constant 0 : i32
    return %c0_i32, %c0_i32_0, %c0_i32_1 : i32, i32, i32
  }
  func.func @transform_4(%arg0: i32) -> (i32, i32) {
    %c0_i32 = arith.constant 0 : i32
    %c0_i32_0 = arith.constant 0 : i32
    %c0_i32_1 = arith.constant 0 : i32
    return %c0_i32, %c0_i32_0 : i32, i32
  }
  func.func @transform_5(%arg0: i32) -> (i32, i32, i32) {
    %c0_i32 = arith.constant 0 : i32
    %c0_i32_0 = arith.constant 0 : i32
    %c0_i32_1 = arith.constant 0 : i32
    %c0_i32_2 = arith.constant 0 : i32
    return %c0_i32, %c0_i32_0, %c0_i32_1 : i32, i32, i32
  }
  func.func @transform_6(%arg0: i32) -> (i32, i32) {
    %c0_i32 = arith.constant 0 : i32
    %c0_i32_0 = arith.constant 0 : i32
    %c0_i32_1 = arith.constant 0 : i32
    return %c0_i32, %c0_i32_0 : i32, i32
  }
  func.func @transform_7(%arg0: i32) -> (i32, i32, i32) {
    %c0_i32 = arith.constant 0 : i32
    %c0_i32_0 = arith.constant 0 : i32
    %c0_i32_1 = arith.constant 0 : i32
    %c0_i32_2 = arith.constant 0 : i32
    return %c0_i32, %c0_i32_0, %c0_i32_1 : i32, i32, i32
  }
  func.func @transform_8(%arg0: i32) -> (i32, i32, i32) {
    %c0_i32 = arith.constant 0 : i32
    %c0_i32_0 = arith.constant 0 : i32
    %c0_i32_1 = arith.constant 0 : i32
    %c0_i32_2 = arith.constant 0 : i32
    return %c0_i32, %c0_i32_0, %c0_i32_1 : i32, i32, i32
  }
  func.func @transform_9(%arg0: i32) -> (i32, i32) {
    %c0_i32 = arith.constant 0 : i32
    %c0_i32_0 = arith.constant 0 : i32
    %c0_i32_1 = arith.constant 0 : i32
    return %c0_i32, %c0_i32_0 : i32, i32
  }
  func.func @transform_10(%arg0: i32) -> (i32, i32) {
    %c0_i32 = arith.constant 0 : i32
    %c0_i32_0 = arith.constant 0 : i32
    return %arg0, %c0_i32 : i32, i32
  }
  func.func @transform_11(%arg0: i32) -> (i32, i32) {
    %c0_i32 = arith.constant 0 : i32
    %c0_i32_0 = arith.constant 0 : i32
    return %arg0, %c0_i32 : i32, i32
  }
  func.func @transform_12(%arg0: i32) -> (i32, i32) {
    %c0_i32 = arith.constant 0 : i32
    %c0_i32_0 = arith.constant 0 : i32
    return %arg0, %c0_i32 : i32, i32
  }
}

module attributes {stable_mosaic.version = 11 : i64} {
  func.func @vae_fwd_kernel(%arg0: i32, %arg1: memref<16x16xf32, #tpu.memory_space<vmem>>, %arg2: memref<16x16xf32, #tpu.memory_space<vmem>>, %arg3: memref<16x128xf32, #tpu.memory_space<vmem>>, %arg4: memref<3x128x128xbf16, #tpu.memory_space<vmem>>, %arg5: memref<16x128xbf16, #tpu.memory_space<vmem>>, %arg6: memref<2x128x16xbf16, #tpu.memory_space<vmem>>, %arg7: memref<128x128xbf16, #tpu.memory_space<vmem>>, %arg8: memref<5x1x128xf32, #tpu.memory_space<vmem>>, %arg9: memref<2x1x16xf32, #tpu.memory_space<vmem>>, %arg10: memref<1x128xf32, #tpu.memory_space<vmem>>, %arg11: memref<16x128xf32, #tpu.memory_space<vmem>>, %arg12: memref<16x16xf32, #tpu.memory_space<vmem>>, %arg13: memref<16x16xf32, #tpu.memory_space<vmem>>) attributes {dimension_semantics = [#tpu.dimension_semantics<parallel>], iteration_bounds = array<i64: 1>, scalar_prefetch = 0 : i64, scratch_operands = 0 : i64, tpu.core_type = #tpu.core_type<tc>, window_params = [{transform_indices = @transform_0, window_bounds = array<i64: 16, 16>}, {transform_indices = @transform_1, window_bounds = array<i64: 16, 16>}, {pipeline_mode = #tpu.pipeline_mode<synchronous>, transform_indices = @transform_2, window_bounds = array<i64: 16, 128>}, {pipeline_mode = #tpu.pipeline_mode<synchronous>, transform_indices = @transform_3, window_bounds = array<i64: 3, 128, 128>}, {pipeline_mode = #tpu.pipeline_mode<synchronous>, transform_indices = @transform_4, window_bounds = array<i64: 16, 128>}, {pipeline_mode = #tpu.pipeline_mode<synchronous>, transform_indices = @transform_5, window_bounds = array<i64: 2, 128, 16>}, {pipeline_mode = #tpu.pipeline_mode<synchronous>, transform_indices = @transform_6, window_bounds = array<i64: 128, 128>}, {pipeline_mode = #tpu.pipeline_mode<synchronous>, transform_indices = @transform_7, window_bounds = array<i64: 5, 1, 128>}, {pipeline_mode = #tpu.pipeline_mode<synchronous>, transform_indices = @transform_8, window_bounds = array<i64: 2, 1, 16>}, {pipeline_mode = #tpu.pipeline_mode<synchronous>, transform_indices = @transform_9, window_bounds = array<i64: 1, 128>}, {transform_indices = @transform_10, window_bounds = array<i64: 16, 128>}, {transform_indices = @transform_11, window_bounds = array<i64: 16, 16>}, {transform_indices = @transform_12, window_bounds = array<i64: 16, 16>}]} {
    %c0 = arith.constant 0 : index
    %c0_0 = arith.constant 0 : index
    %0 = vector.load %arg1[%c0, %c0_0] : memref<16x16xf32, #tpu.memory_space<vmem>>, vector<16x16xf32>
    %c0_1 = arith.constant 0 : index
    %c0_2 = arith.constant 0 : index
    %1 = vector.load %arg3[%c0_1, %c0_2] : memref<16x128xf32, #tpu.memory_space<vmem>>, vector<16x128xf32>
    %cst = arith.constant dense<0.000000e+00> : vector<16x128xf32>
    %2 = tpu.matmul %0, %1, %cst {dimension_numbers = #tpu.dot_dimension_numbers<[1], [0], [0], [1], [0, 0, 1, 1], [], []>} : vector<16x16xf32>, vector<16x128xf32>, vector<16x128xf32> -> vector<16x128xf32>
    %c0_3 = arith.constant 0 : index
    %c0_4 = arith.constant 0 : index
    %c0_5 = arith.constant 0 : index
    %3 = vector.load %arg8[%c0_3, %c0_4, %c0_5] : memref<5x1x128xf32, #tpu.memory_space<vmem>>, vector<1x1x128xf32>
    %4 = vector.shape_cast %3 : vector<1x1x128xf32> to vector<1x128xf32>
    %5 = vector.broadcast %4 : vector<1x128xf32> to vector<16x128xf32>
    %6 = arith.addf %2, %5 : vector<16x128xf32>
    %cst_6 = arith.constant 0.00999999977 : f32
    %7 = vector.broadcast %cst_6 : f32 to vector<16x128xf32>
    %8 = arith.mulf %7, %6 : vector<16x128xf32>
    %9 = arith.maximumf %6, %8 : vector<16x128xf32>
    %c0_7 = arith.constant 0 : index
    %c0_8 = arith.constant 0 : index
    %c0_9 = arith.constant 0 : index
    %10 = vector.load %arg4[%c0_7, %c0_8, %c0_9] : memref<3x128x128xbf16, #tpu.memory_space<vmem>>, vector<1x128x128xbf16>
    %11 = vector.shape_cast %10 : vector<1x128x128xbf16> to vector<128x128xbf16>
    %12 = arith.truncf %9 : vector<16x128xf32> to vector<16x128xbf16>
    %cst_10 = arith.constant dense<0.000000e+00> : vector<16x128xf32>
    %13 = tpu.matmul %12, %11, %cst_10 {dimension_numbers = #tpu.dot_dimension_numbers<[1], [0], [0], [1], [0, 0, 1, 1], [], []>} : vector<16x128xbf16>, vector<128x128xbf16>, vector<16x128xf32> -> vector<16x128xf32>
    %c1 = arith.constant 1 : index
    %c0_11 = arith.constant 0 : index
    %c0_12 = arith.constant 0 : index
    %14 = vector.load %arg8[%c1, %c0_11, %c0_12] : memref<5x1x128xf32, #tpu.memory_space<vmem>>, vector<1x1x128xf32>
    %15 = vector.shape_cast %14 : vector<1x1x128xf32> to vector<1x128xf32>
    %16 = vector.broadcast %15 : vector<1x128xf32> to vector<16x128xf32>
    %17 = arith.addf %13, %16 : vector<16x128xf32>
    %cst_13 = arith.constant 0.00999999977 : f32
    %18 = vector.broadcast %cst_13 : f32 to vector<16x128xf32>
    %19 = arith.mulf %18, %17 : vector<16x128xf32>
    %20 = arith.maximumf %17, %19 : vector<16x128xf32>
    %c1_14 = arith.constant 1 : index
    %c0_15 = arith.constant 0 : index
    %c0_16 = arith.constant 0 : index
    %21 = vector.load %arg4[%c1_14, %c0_15, %c0_16] : memref<3x128x128xbf16, #tpu.memory_space<vmem>>, vector<1x128x128xbf16>
    %22 = vector.shape_cast %21 : vector<1x128x128xbf16> to vector<128x128xbf16>
    %23 = arith.truncf %20 : vector<16x128xf32> to vector<16x128xbf16>
    %cst_17 = arith.constant dense<0.000000e+00> : vector<16x128xf32>
    %24 = tpu.matmul %23, %22, %cst_17 {dimension_numbers = #tpu.dot_dimension_numbers<[1], [0], [0], [1], [0, 0, 1, 1], [], []>} : vector<16x128xbf16>, vector<128x128xbf16>, vector<16x128xf32> -> vector<16x128xf32>
    %c2 = arith.constant 2 : index
    %c0_18 = arith.constant 0 : index
    %c0_19 = arith.constant 0 : index
    %25 = vector.load %arg8[%c2, %c0_18, %c0_19] : memref<5x1x128xf32, #tpu.memory_space<vmem>>, vector<1x1x128xf32>
    %26 = vector.shape_cast %25 : vector<1x1x128xf32> to vector<1x128xf32>
    %27 = vector.broadcast %26 : vector<1x128xf32> to vector<16x128xf32>
    %28 = arith.addf %24, %27 : vector<16x128xf32>
    %c0_20 = arith.constant 0 : index
    %c0_21 = arith.constant 0 : index
    %c0_22 = arith.constant 0 : index
    %29 = vector.load %arg6[%c0_20, %c0_21, %c0_22] : memref<2x128x16xbf16, #tpu.memory_space<vmem>>, vector<1x128x16xbf16>
    %30 = vector.shape_cast %29 : vector<1x128x16xbf16> to vector<128x16xbf16>
    %31 = arith.truncf %28 : vector<16x128xf32> to vector<16x128xbf16>
    %cst_23 = arith.constant dense<0.000000e+00> : vector<16x16xf32>
    %32 = tpu.matmul %31, %30, %cst_23 {dimension_numbers = #tpu.dot_dimension_numbers<[1], [0], [0], [1], [0, 0, 1, 1], [], []>} : vector<16x128xbf16>, vector<128x16xbf16>, vector<16x16xf32> -> vector<16x16xf32>
    %c0_24 = arith.constant 0 : index
    %c0_25 = arith.constant 0 : index
    %c0_26 = arith.constant 0 : index
    %33 = vector.load %arg9[%c0_24, %c0_25, %c0_26] : memref<2x1x16xf32, #tpu.memory_space<vmem>>, vector<1x1x16xf32>
    %34 = vector.shape_cast %33 : vector<1x1x16xf32> to vector<1x16xf32>
    %35 = vector.broadcast %34 : vector<1x16xf32> to vector<16x16xf32>
    %36 = arith.addf %32, %35 : vector<16x16xf32>
    %c1_27 = arith.constant 1 : index
    %c0_28 = arith.constant 0 : index
    %c0_29 = arith.constant 0 : index
    %37 = vector.load %arg6[%c1_27, %c0_28, %c0_29] : memref<2x128x16xbf16, #tpu.memory_space<vmem>>, vector<1x128x16xbf16>
    %38 = vector.shape_cast %37 : vector<1x128x16xbf16> to vector<128x16xbf16>
    %39 = arith.truncf %28 : vector<16x128xf32> to vector<16x128xbf16>
    %cst_30 = arith.constant dense<0.000000e+00> : vector<16x16xf32>
    %40 = tpu.matmul %39, %38, %cst_30 {dimension_numbers = #tpu.dot_dimension_numbers<[1], [0], [0], [1], [0, 0, 1, 1], [], []>} : vector<16x128xbf16>, vector<128x16xbf16>, vector<16x16xf32> -> vector<16x16xf32>
    %c1_31 = arith.constant 1 : index
    %c0_32 = arith.constant 0 : index
    %c0_33 = arith.constant 0 : index
    %41 = vector.load %arg9[%c1_31, %c0_32, %c0_33] : memref<2x1x16xf32, #tpu.memory_space<vmem>>, vector<1x1x16xf32>
    %42 = vector.shape_cast %41 : vector<1x1x16xf32> to vector<1x16xf32>
    %43 = vector.broadcast %42 : vector<1x16xf32> to vector<16x16xf32>
    %44 = arith.addf %40, %43 : vector<16x16xf32>
    %c0_34 = arith.constant 0 : index
    %c0_35 = arith.constant 0 : index
    %45 = vector.load %arg2[%c0_34, %c0_35] : memref<16x16xf32, #tpu.memory_space<vmem>>, vector<16x16xf32>
    %cst_36 = arith.constant 5.000000e-01 : f32
    %46 = vector.broadcast %cst_36 : f32 to vector<16x16xf32>
    %47 = arith.mulf %46, %44 : vector<16x16xf32>
    %48 = math.exp %47 : vector<16x16xf32>
    %49 = arith.mulf %45, %48 : vector<16x16xf32>
    %50 = arith.addf %36, %49 : vector<16x16xf32>
    %c0_37 = arith.constant 0 : index
    %c0_38 = arith.constant 0 : index
    %51 = vector.load %arg5[%c0_37, %c0_38] : memref<16x128xbf16, #tpu.memory_space<vmem>>, vector<16x128xbf16>
    %52 = arith.truncf %50 : vector<16x16xf32> to vector<16x16xbf16>
    %cst_39 = arith.constant dense<0.000000e+00> : vector<16x128xf32>
    %53 = tpu.matmul %52, %51, %cst_39 {dimension_numbers = #tpu.dot_dimension_numbers<[1], [0], [0], [1], [0, 0, 1, 1], [], []>} : vector<16x16xbf16>, vector<16x128xbf16>, vector<16x128xf32> -> vector<16x128xf32>
    %c3 = arith.constant 3 : index
    %c0_40 = arith.constant 0 : index
    %c0_41 = arith.constant 0 : index
    %54 = vector.load %arg8[%c3, %c0_40, %c0_41] : memref<5x1x128xf32, #tpu.memory_space<vmem>>, vector<1x1x128xf32>
    %55 = vector.shape_cast %54 : vector<1x1x128xf32> to vector<1x128xf32>
    %56 = vector.broadcast %55 : vector<1x128xf32> to vector<16x128xf32>
    %57 = arith.addf %53, %56 : vector<16x128xf32>
    %cst_42 = arith.constant 0.00999999977 : f32
    %58 = vector.broadcast %cst_42 : f32 to vector<16x128xf32>
    %59 = arith.mulf %58, %57 : vector<16x128xf32>
    %60 = arith.maximumf %57, %59 : vector<16x128xf32>
    %c2_43 = arith.constant 2 : index
    %c0_44 = arith.constant 0 : index
    %c0_45 = arith.constant 0 : index
    %61 = vector.load %arg4[%c2_43, %c0_44, %c0_45] : memref<3x128x128xbf16, #tpu.memory_space<vmem>>, vector<1x128x128xbf16>
    %62 = vector.shape_cast %61 : vector<1x128x128xbf16> to vector<128x128xbf16>
    %63 = arith.truncf %60 : vector<16x128xf32> to vector<16x128xbf16>
    %cst_46 = arith.constant dense<0.000000e+00> : vector<16x128xf32>
    %64 = tpu.matmul %63, %62, %cst_46 {dimension_numbers = #tpu.dot_dimension_numbers<[1], [0], [0], [1], [0, 0, 1, 1], [], []>} : vector<16x128xbf16>, vector<128x128xbf16>, vector<16x128xf32> -> vector<16x128xf32>
    %c4 = arith.constant 4 : index
    %c0_47 = arith.constant 0 : index
    %c0_48 = arith.constant 0 : index
    %65 = vector.load %arg8[%c4, %c0_47, %c0_48] : memref<5x1x128xf32, #tpu.memory_space<vmem>>, vector<1x1x128xf32>
    %66 = vector.shape_cast %65 : vector<1x1x128xf32> to vector<1x128xf32>
    %67 = vector.broadcast %66 : vector<1x128xf32> to vector<16x128xf32>
    %68 = arith.addf %64, %67 : vector<16x128xf32>
    %cst_49 = arith.constant 0.00999999977 : f32
    %69 = vector.broadcast %cst_49 : f32 to vector<16x128xf32>
    %70 = arith.mulf %69, %68 : vector<16x128xf32>
    %71 = arith.maximumf %68, %70 : vector<16x128xf32>
    %c0_50 = arith.constant 0 : index
    %c0_51 = arith.constant 0 : index
    %72 = vector.load %arg7[%c0_50, %c0_51] : memref<128x128xbf16, #tpu.memory_space<vmem>>, vector<128x128xbf16>
    %73 = arith.truncf %71 : vector<16x128xf32> to vector<16x128xbf16>
    %cst_52 = arith.constant dense<0.000000e+00> : vector<16x128xf32>
    %74 = tpu.matmul %73, %72, %cst_52 {dimension_numbers = #tpu.dot_dimension_numbers<[1], [0], [0], [1], [0, 0, 1, 1], [], []>} : vector<16x128xbf16>, vector<128x128xbf16>, vector<16x128xf32> -> vector<16x128xf32>
    %c0_53 = arith.constant 0 : index
    %c0_54 = arith.constant 0 : index
    %75 = vector.load %arg10[%c0_53, %c0_54] : memref<1x128xf32, #tpu.memory_space<vmem>>, vector<1x128xf32>
    %76 = vector.broadcast %75 : vector<1x128xf32> to vector<16x128xf32>
    %77 = arith.addf %74, %76 : vector<16x128xf32>
    %c0_55 = arith.constant 0 : index
    %c0_56 = arith.constant 0 : index
    %78 = vector.load %arg11[%c0_55, %c0_56] : memref<16x128xf32, #tpu.memory_space<vmem>>, vector<16x128xf32>
    tpu.vector_store %arg11[%c0_55, %c0_56], %77 {strides = array<i32>} : memref<16x128xf32, #tpu.memory_space<vmem>>, vector<16x128xf32>,
    %c0_57 = arith.constant 0 : index
    %c0_58 = arith.constant 0 : index
    %79 = vector.load %arg12[%c0_57, %c0_58] : memref<16x16xf32, #tpu.memory_space<vmem>>, vector<16x16xf32>
    tpu.vector_store %arg12[%c0_57, %c0_58], %36 {strides = array<i32>} : memref<16x16xf32, #tpu.memory_space<vmem>>, vector<16x16xf32>,
    %c0_59 = arith.constant 0 : index
    %c0_60 = arith.constant 0 : index
    %80 = vector.load %arg13[%c0_59, %c0_60] : memref<16x16xf32, #tpu.memory_space<vmem>>, vector<16x16xf32>
    tpu.vector_store %arg13[%c0_59, %c0_60], %44 {strides = array<i32>} : memref<16x16xf32, #tpu.memory_space<vmem>>, vector<16x16xf32>,
    return
  }
  func.func @transform_0(%arg0: i32) -> (i32, i32) {
    %c0_i32 = arith.constant 0 : i32
    %c0_i32_0 = arith.constant 0 : i32
    return %arg0, %c0_i32 : i32, i32
  }
  func.func @transform_1(%arg0: i32) -> (i32, i32) {
    %c0_i32 = arith.constant 0 : i32
    %c0_i32_0 = arith.constant 0 : i32
    return %arg0, %c0_i32 : i32, i32
  }
  func.func @transform_2(%arg0: i32) -> (i32, i32) {
    %c0_i32 = arith.constant 0 : i32
    %c0_i32_0 = arith.constant 0 : i32
    %c0_i32_1 = arith.constant 0 : i32
    return %c0_i32, %c0_i32_0 : i32, i32
  }
  func.func @transform_3(%arg0: i32) -> (i32, i32, i32) {
    %c0_i32 = arith.constant 0 : i32
    %c0_i32_0 = arith.constant 0 : i32
    %c0_i32_1 = arith.constant 0 : i32
    %c0_i32_2 = arith.constant 0 : i32
    return %c0_i32, %c0_i32_0, %c0_i32_1 : i32, i32, i32
  }
  func.func @transform_4(%arg0: i32) -> (i32, i32) {
    %c0_i32 = arith.constant 0 : i32
    %c0_i32_0 = arith.constant 0 : i32
    %c0_i32_1 = arith.constant 0 : i32
    return %c0_i32, %c0_i32_0 : i32, i32
  }
  func.func @transform_5(%arg0: i32) -> (i32, i32, i32) {
    %c0_i32 = arith.constant 0 : i32
    %c0_i32_0 = arith.constant 0 : i32
    %c0_i32_1 = arith.constant 0 : i32
    %c0_i32_2 = arith.constant 0 : i32
    return %c0_i32, %c0_i32_0, %c0_i32_1 : i32, i32, i32
  }
  func.func @transform_6(%arg0: i32) -> (i32, i32) {
    %c0_i32 = arith.constant 0 : i32
    %c0_i32_0 = arith.constant 0 : i32
    %c0_i32_1 = arith.constant 0 : i32
    return %c0_i32, %c0_i32_0 : i32, i32
  }
  func.func @transform_7(%arg0: i32) -> (i32, i32, i32) {
    %c0_i32 = arith.constant 0 : i32
    %c0_i32_0 = arith.constant 0 : i32
    %c0_i32_1 = arith.constant 0 : i32
    %c0_i32_2 = arith.constant 0 : i32
    return %c0_i32, %c0_i32_0, %c0_i32_1 : i32, i32, i32
  }
  func.func @transform_8(%arg0: i32) -> (i32, i32, i32) {
    %c0_i32 = arith.constant 0 : i32
    %c0_i32_0 = arith.constant 0 : i32
    %c0_i32_1 = arith.constant 0 : i32
    %c0_i32_2 = arith.constant 0 : i32
    return %c0_i32, %c0_i32_0, %c0_i32_1 : i32, i32, i32
  }
  func.func @transform_9(%arg0: i32) -> (i32, i32) {
    %c0_i32 = arith.constant 0 : i32
    %c0_i32_0 = arith.constant 0 : i32
    %c0_i32_1 = arith.constant 0 : i32
    return %c0_i32, %c0_i32_0 : i32, i32
  }
  func.func @transform_10(%arg0: i32) -> (i32, i32) {
    %c0_i32 = arith.constant 0 : i32
    %c0_i32_0 = arith.constant 0 : i32
    return %arg0, %c0_i32 : i32, i32
  }
  func.func @transform_11(%arg0: i32) -> (i32, i32) {
    %c0_i32 = arith.constant 0 : i32
    %c0_i32_0 = arith.constant 0 : i32
    return %arg0, %c0_i32 : i32, i32
  }
  func.func @transform_12(%arg0: i32) -> (i32, i32) {
    %c0_i32 = arith.constant 0 : i32
    %c0_i32_0 = arith.constant 0 : i32
    return %arg0, %c0_i32 : i32, i32
  }
}

</mosaic_0001>

<llo_original>
// kernel: tpu_custom_call.1
$region0: #{tpu_custom_call.1}
  #allocation0 [shape = 'u32[]', space=smem, size = 0x4, offset = 0x4, fixed_abs, tag = 'smem constant byte address 0x4 - core index']
  #allocation1 [shape = 'u32[144,128]{1,0:T(1,128)}', space=vmem, size = 0x12000, scoped, tag = 'internal scratch']
  %s0 = inlined_call_operand.vmem [shape: f32[16,16], index: 0, kind: input, shape index: {}]
  %s1 = inlined_call_operand.vmem [shape: f32[16,16], index: 1, kind: input, shape index: {}]
  %s2 = inlined_call_operand.vmem [shape: f32[16,128], index: 2, kind: input, shape index: {}]
  %s3 = inlined_call_operand.hbm [shape: bf16[3,128,128], index: 3, kind: input, shape index: {}]
  %s4 = inlined_call_operand.vmem [shape: bf16[16,128], index: 4, kind: input, shape index: {}]
  %s5 = inlined_call_operand.vmem [shape: bf16[2,128,16], index: 5, kind: input, shape index: {}]
  %s6 = inlined_call_operand.vmem [shape: bf16[128,128], index: 6, kind: input, shape index: {}]
  %s7 = inlined_call_operand.vmem [shape: f32[5,1,128], index: 7, kind: input, shape index: {}]
  %s8 = inlined_call_operand.vmem [shape: f32[2,1,16], index: 8, kind: input, shape index: {}]
  %s9 = inlined_call_operand.vmem [shape: f32[1,128], index: 9, kind: input, shape index: {}]
  %s10 = inlined_call_operand.hbm [shape: f32[16,128], index: 10, kind: output, shape index: {0}]
  %s11 = inlined_call_operand.hbm [shape: f32[16,16], index: 11, kind: output, shape index: {1}]
  %s12 = inlined_call_operand.hbm [shape: f32[16,16], index: 12, kind: output, shape index: {2}]
  %13 = xla_tuple %s10, %s11, %s12
  %s14 = sld [smem:[#allocation0]]
  $region70: #{tpu_custom_call.1} parent=0
    _
  %s16 = ssub.s32 1, %s14
  %s17 = scalar_select 0, %s16, %s14
  $region1: #{tpu_custom_call.1} parent=0
    #allocation2 [shape = 'u8[98304]{0}', space=vmem, size = 0x18000, scoped, tag = 'input window, operand 3, single buffered']
    #allocation3 [shape = 's32[1]{0}', space=sflag, size = 0x4, scoped, tag = 'scoped memory for tpu_custom_call.1']
    #allocation4 [shape = 's32[1]{0}', space=sflag, size = 0x4, scoped, tag = 'scoped memory for tpu_custom_call.1']
    #allocation5 [shape = 'u8[8192]{0}', space=vmem, size = 0x2000, scoped, tag = 'output window, operand 0, single buffered']
    #allocation6 [shape = 'u8[8192]{0}', space=vmem, size = 0x2000, scoped, tag = 'output window, operand 1, single buffered']
    #allocation7 [shape = 's32[1]{0}', space=sflag, size = 0x4, scoped, tag = 'scoped memory for tpu_custom_call.1']
    #allocation8 [shape = 'u8[8192]{0}', space=vmem, size = 0x2000, scoped, tag = 'output window, operand 2, single buffered']
    %18 = vsyncpa [#allocation3], 0
    %19 = vsyncpa [#allocation4], 0
    %20 = vsyncpa [#allocation7], 0
    // Predicated region
    $region2: #{tpu_custom_call.1} parent=1 // pred_check
      _
    $region3: #{tpu_custom_call.1} parent=1 // pred_check_branch
      %22 = sbr.rel (0) target = $region5
    $region4: #{tpu_custom_call.1} parent=1 // pred_region
      _
    $region5: #{tpu_custom_call.1} parent=1 // pred_fallthru
      _
    // Predicated region
    $region6: #{tpu_custom_call.1} parent=1 // pred_check
      _
    $region7: #{tpu_custom_call.1} parent=1 // pred_check_branch
      %24 = sbr.rel (0) target = $region9
    $region8: #{tpu_custom_call.1} parent=1 // pred_region
      _
    $region9: #{tpu_custom_call.1} parent=1 // pred_fallthru
      _
    // Predicated region
    $region10: #{tpu_custom_call.1} parent=1 // pred_check
      _
    $region11: #{tpu_custom_call.1} parent=1 // pred_check_branch
      %26 = sbr.rel (0) target = $region13
    $region12: #{tpu_custom_call.1} parent=1 // pred_region
      _
    $region13: #{tpu_custom_call.1} parent=1 // pred_fallthru
      _
    // Predicated region
    $region14: #{tpu_custom_call.1} parent=1 // pred_check
      _
    $region15: #{tpu_custom_call.1} parent=1 // pred_check_branch
      %28 = sbr.rel (0) target = $region17
    $region16: #{tpu_custom_call.1} parent=1 // pred_region
      %s30 = ssub.s32 3072, 3072
      %31 = vsyncadd [#allocation3], %s30
      %s32 = sshll.u32 [#allocation2], 4
      %s33 = int_to_ptr.vmem [resolvable:$true] %s32
      %38 = dma.hbm_to_vmem [thread:$0]  %s3, 3072, %s33, [#allocation3], 64, 64, 4
    $region17: #{tpu_custom_call.1} parent=1 // pred_fallthru
      _
    // Predicated region
    $region18: #{tpu_custom_call.1} parent=1 // pred_check
      _
    $region19: #{tpu_custom_call.1} parent=1 // pred_check_branch
      %40 = sbr.rel (0) target = $region21
    $region20: #{tpu_custom_call.1} parent=1 // pred_region
      _
    $region21: #{tpu_custom_call.1} parent=1 // pred_fallthru
      _
    // Predicated region
    $region22: #{tpu_custom_call.1} parent=1 // pred_check
      _
    $region23: #{tpu_custom_call.1} parent=1 // pred_check_branch
      %42 = sbr.rel (0) target = $region25
    $region24: #{tpu_custom_call.1} parent=1 // pred_region
      _
    $region25: #{tpu_custom_call.1} parent=1 // pred_fallthru
      _
    // Predicated region
    $region26: #{tpu_custom_call.1} parent=1 // pred_check
      _
    $region27: #{tpu_custom_call.1} parent=1 // pred_check_branch
      %44 = sbr.rel (0) target = $region29
    $region28: #{tpu_custom_call.1} parent=1 // pred_region
      _
    $region29: #{tpu_custom_call.1} parent=1 // pred_fallthru
      _
    // Predicated region
    $region30: #{tpu_custom_call.1} parent=1 // pred_check
      _
    $region31: #{tpu_custom_call.1} parent=1 // pred_check_branch
      %46 = sbr.rel (0) target = $region33
    $region32: #{tpu_custom_call.1} parent=1 // pred_region
      _
    $region33: #{tpu_custom_call.1} parent=1 // pred_fallthru
      _
    // Predicated region
    $region34: #{tpu_custom_call.1} parent=1 // pred_check
      _
    $region35: #{tpu_custom_call.1} parent=1 // pred_check_branch
      %48 = sbr.rel (0) target = $region37
    $region36: #{tpu_custom_call.1} parent=1 // pred_region
      _
    $region37: #{tpu_custom_call.1} parent=1 // pred_fallthru
      _
    // Predicated region
    $region38: #{tpu_custom_call.1} parent=1 // pred_check
      _
    $region39: #{tpu_custom_call.1} parent=1 // pred_check_branch
      %50 = sbr.rel (0) target = $region41
    $region40: #{tpu_custom_call.1} parent=1 // pred_region
      _
    $region41: #{tpu_custom_call.1} parent=1 // pred_fallthru
      _
    // Predicated region
    $region42: #{tpu_custom_call.1} parent=1 // pred_check
      _
    $region43: #{tpu_custom_call.1} parent=1 // pred_check_branch
      %52 = sbr.rel (0) target = $region45
    $region44: #{tpu_custom_call.1} parent=1 // pred_region
      %53 = dma.done [#allocation3], 3072
    $region45: #{tpu_custom_call.1} parent=1 // pred_fallthru
      _
    %v55 = vld [vmem:[%s0] sm:$0xff]
    %v56 = vld [vmem:[%s0 + $0x8] sm:$0xff]
    %v57 = vld [vmem:[%s2] sm:$0xff]
    %v58 = vld [vmem:[%s2 + $0x8] sm:$0xff]
    %v59 = vld [vmem:[%s7] sm:$0x1]
    %v61 = vlaneseq
    %v62 = vshrl.u32 %v61, 7
    %v63 = vsub.s32 0, %v62
    %v64 = vrot.slane %v59, %v63
    %vm66 = vcmask 130048
    %v68 = vsel %vm66, %v55, 0
    %v71 = vsel %vm66, %v56, 0
    %73 = vmatprep.subr.mxu0 0.0
    %74 = vmatpush1.msra.mxu0 %v57
    %75 = vmatprep.subr.mxu0 0.0
    %76 = vmatpush1.msra.mxu0 %v58
    %77 = vmatprep.subr.mxu0 0.0
    %78 = vmatpush1.msra.mxu0 0.0
    %79 = vmatprep.subr.mxu0 0.0
    %80 = vmatpush1.msra.mxu0 0.0
    %81 = vmatprep.subr.mxu0 0.0
    %82 = vmatpush1.msra.mxu0 0.0
    %83 = vmatprep.subr.mxu0 0.0
    %84 = vmatpush1.msra.mxu0 0.0
    %85 = vmatprep.subr.mxu0 0.0
    %86 = vmatpush1.msra.mxu0 0.0
    %87 = vmatprep.subr.mxu0 0.0
    %88 = vmatpush1.msra.mxu0 0.0
    %89 = vmatprep.subr.mxu0 0.0
    %90 = vmatpush1.msra.mxu0 0.0
    %91 = vmatprep.subr.mxu0 0.0
    %92 = vmatpush1.msra.mxu0 0.0
    %93 = vmatprep.subr.mxu0 0.0
    %94 = vmatpush1.msra.mxu0 0.0
    %95 = vmatprep.subr.mxu0 0.0
    %96 = vmatpush1.msra.mxu0 0.0
    %97 = vmatprep.subr.mxu0 0.0
    %98 = vmatpush1.msra.mxu0 0.0
    %99 = vmatprep.subr.mxu0 0.0
    %100 = vmatpush1.msra.mxu0 0.0
    %101 = vmatprep.subr.mxu0 0.0
    %102 = vmatpush1.msra.mxu0 0.0
    %103 = vmatprep.subr.mxu0 0.0
    %104 = vmatpush1.msra.mxu0 0.0
    %105 = vmatprep.subr.mxu0 0.0
    %106 = vmatpush1.msra.mxu0 0.0
    %107 = vmatprep.subr.mxu0 0.0
    %108 = vmatpush1.msra.mxu0 0.0
    %109 = vmatprep.subr.mxu0 0.0
    %110 = vmatpush1.msra.mxu0 0.0
    %111 = vmatprep.subr.mxu0 0.0
    %112 = vmatpush1.msra.mxu0 0.0
    %113 = vmatprep.subr.mxu0 0.0
    %114 = vmatpush1.msra.mxu0 0.0
    %115 = vmatprep.subr.mxu0 0.0
    %116 = vmatpush1.msra.mxu0 0.0
    %117 = vmatprep.subr.mxu0 0.0
    %118 = vmatpush1.msra.mxu0 0.0
    %119 = vmatprep.subr.mxu0 0.0
    %120 = vmatpush1.msra.mxu0 0.0
    %121 = vmatprep.subr.mxu0 0.0
    %122 = vmatpush1.msra.mxu0 0.0
    %123 = vmatprep.subr.mxu0 0.0
    %124 = vmatpush1.msra.mxu0 0.0
    %125 = vmatprep.subr.mxu0 0.0
    %126 = vmatpush1.msra.mxu0 0.0
    %127 = vmatprep.subr.mxu0 0.0
    %128 = vmatpush1.msra.mxu0 0.0
    %129 = vmatprep.subr.mxu0 0.0
    %130 = vmatpush1.msra.mxu0 0.0
    %131 = vmatprep.subr.mxu0 0.0
    %132 = vmatpush1.msra.mxu0 0.0
    %133 = vmatprep.subr.mxu0 0.0
    %134 = vmatpush1.msra.mxu0 0.0
    %135 = vmatprep.subr.mxu0 0.0
    %136 = vmatpush1.msra.mxu0 0.0
    %137 = vmatprep.mubr.f32.mxu0 0.0
    %138 = vmatmul.mubr.f32.gmra.mrb[0].mxu0 %v68
    %v139 = vpop.f32.mrb[0].mxu0
    %v140 = vadd.f32 %v64, %v139
    %v141 = vpop.f32.mrb[0].mxu0
    %142 = vmatprep.mubr.f32.mxu0 0.0
    %143 = vmatmul.mubr.f32.gmra.mrb[0].mxu0 %v71
    %v144 = vpop.f32.mrb[0].mxu0
    %v145 = vadd.f32 %v64, %v144
    %v146 = vpop.f32.mrb[0].mxu0
    %147 = vdwg.mxu0
    %v148 = vmul.f32 %v140, 0.01
    %v149 = vmul.f32 %v145, 0.01
    %v150 = vmax.f32 %v140, %v148
    %v151 = vmax.f32 %v145, %v149
    %v152 = vld [vmem:[#allocation2] sm:$0xf]
    %v153 = vld [vmem:[#allocation2 + $0x4] sm:$0xf]
    %v154 = vld [vmem:[#allocation2 + $0x8] sm:$0xf]
    %v155 = vld [vmem:[#allocation2 + $0xc] sm:$0xf]
    %v156 = vld [vmem:[#allocation2 + $0x10] sm:$0xf]
    %v157 = vld [vmem:[#allocation2 + $0x14] sm:$0xf]
    %v158 = vld [vmem:[#allocation2 + $0x18] sm:$0xf]
    %v159 = vld [vmem:[#allocation2 + $0x1c] sm:$0xf]
    %v160 = vld [vmem:[#allocation2 + $0x20] sm:$0xf]
    %v161 = vld [vmem:[#allocation2 + $0x24] sm:$0xf]
    %v162 = vld [vmem:[#allocation2 + $0x28] sm:$0xf]
    %v163 = vld [vmem:[#allocation2 + $0x2c] sm:$0xf]
    %v164 = vld [vmem:[#allocation2 + $0x30] sm:$0xf]
    %v165 = vld [vmem:[#allocation2 + $0x34] sm:$0xf]
    %v166 = vld [vmem:[#allocation2 + $0x38] sm:$0xf]
    %v167 = vld [vmem:[#allocation2 + $0x3c] sm:$0xf]
    %v168 = vpack.c.bf16 %v151, %v150
    %s169 = scalar_lea.vmem %s7, 1
    %v170 = vld [vmem:[%s169] sm:$0x1]
    %v172 = vlaneseq
    %v173 = vshrl.u32 %v172, 7
    %v174 = vsub.s32 0, %v173
    %v175 = vrot.slane %v170, %v174
    %v193 = vunpack.c.l.b16 %v152
    %v194 = vunpack.c.l.b16 %v153
    %v195 = vunpack.c.l.b16 %v154
    %v196 = vunpack.c.l.b16 %v155
    %v197 = vunpack.c.l.b16 %v156
    %v198 = vunpack.c.l.b16 %v157
    %v199 = vunpack.c.l.b16 %v158
    %v200 = vunpack.c.l.b16 %v159
    %v201 = vunpack.c.l.b16 %v160
    %v202 = vunpack.c.l.b16 %v161
    %v203 = vunpack.c.l.b16 %v162
    %v204 = vunpack.c.l.b16 %v163
    %v205 = vunpack.c.l.b16 %v164
    %v206 = vunpack.c.l.b16 %v165
    %v207 = vunpack.c.l.b16 %v166
    %v208 = vunpack.c.l.b16 %v167
    %v209 = vpack.c.b16 %v194, %v193
    %v210 = vpack.c.b16 %v196, %v195
    %v211 = vpack.c.b16 %v198, %v197
    %v212 = vpack.c.b16 %v200, %v199
    %v213 = vpack.c.b16 %v202, %v201
    %v214 = vpack.c.b16 %v204, %v203
    %v215 = vpack.c.b16 %v206, %v205
    %v216 = vpack.c.b16 %v208, %v207
    %225 = vmatprep.subr.bf16.mxu0 0
    %226 = vmatpush1.bf16.msra.mxu0 %v209
    %227 = vmatprep.subr.bf16.mxu0 0
    %228 = vmatpush1.bf16.msra.mxu0 %v210
    %229 = vmatprep.subr.bf16.mxu0 0
    %230 = vmatpush1.bf16.msra.mxu0 %v211
    %231 = vmatprep.subr.bf16.mxu0 0
    %232 = vmatpush1.bf16.msra.mxu0 %v212
    %233 = vmatprep.subr.bf16.mxu0 0
    %234 = vmatpush1.bf16.msra.mxu0 %v213
    %235 = vmatprep.subr.bf16.mxu0 0
    %236 = vmatpush1.bf16.msra.mxu0 %v214
    %237 = vmatprep.subr.bf16.mxu0 0
    %238 = vmatpush1.bf16.msra.mxu0 %v215
    %239 = vmatprep.subr.bf16.mxu0 0
    %240 = vmatpush1.bf16.msra.mxu0 %v216
    %241 = vmatprep.subr.bf16.mxu0 0
    %242 = vmatpush1.bf16.msra.mxu0 0
    %243 = vmatprep.subr.bf16.mxu0 0
    %244 = vmatpush1.bf16.msra.mxu0 0
    %245 = vmatprep.subr.bf16.mxu0 0
    %246 = vmatpush1.bf16.msra.mxu0 0
    %247 = vmatprep.subr.bf16.mxu0 0
    %248 = vmatpush1.bf16.msra.mxu0 0
    %249 = vmatprep.subr.bf16.mxu0 0
    %250 = vmatpush1.bf16.msra.mxu0 0
    %251 = vmatprep.subr.bf16.mxu0 0
    %252 = vmatpush1.bf16.msra.mxu0 0
    %253 = vmatprep.subr.bf16.mxu0 0
    %254 = vmatpush1.bf16.msra.mxu0 0
    %255 = vmatprep.subr.bf16.mxu0 0
    %256 = vmatpush1.bf16.msra.mxu0 0
    %257 = vmatprep.mubr.bf16.mxu0 0
    %258 = vmatmul.mubr.bf16.gmra.mrb[0].mxu0 %v168
    %v259 = vpop.f32.mrb[0].mxu0
    %v260 = vadd.f32 %v175, %v259
    %v261 = vpop.f32.mrb[0].mxu0
    %v262 = vpop.f32.mrb[0].mxu0
    %v263 = vadd.f32 %v175, %v262
    %v264 = vpop.f32.mrb[0].mxu0
    %265 = vdwg.mxu0
    %v266 = vmul.f32 %v260, 0.01
    %v267 = vmul.f32 %v263, 0.01
    %v268 = vmax.f32 %v260, %v266
    %v269 = vmax.f32 %v263, %v267
    %s270 = scalar_lea.vmem [#allocation2], 64
    %v271 = vld [vmem:[%s270] sm:$0xf]
    %v272 = vld [vmem:[%s270 + $0x4] sm:$0xf]
    %v273 = vld [vmem:[%s270 + $0x8] sm:$0xf]
    %v274 = vld [vmem:[%s270 + $0xc] sm:$0xf]
    %v275 = vld [vmem:[%s270 + $0x10] sm:$0xf]
    %v276 = vld [vmem:[%s270 + $0x14] sm:$0xf]
    %v277 = vld [vmem:[%s270 + $0x18] sm:$0xf]
    %v278 = vld [vmem:[%s270 + $0x1c] sm:$0xf]
    %v279 = vld [vmem:[%s270 + $0x20] sm:$0xf]
    %v280 = vld [vmem:[%s270 + $0x24] sm:$0xf]
    %v281 = vld [vmem:[%s270 + $0x28] sm:$0xf]
    %v282 = vld [vmem:[%s270 + $0x2c] sm:$0xf]
    %v283 = vld [vmem:[%s270 + $0x30] sm:$0xf]
    %v284 = vld [vmem:[%s270 + $0x34] sm:$0xf]
    %v285 = vld [vmem:[%s270 + $0x38] sm:$0xf]
    %v286 = vld [vmem:[%s270 + $0x3c] sm:$0xf]
    %v287 = vpack.c.bf16 %v269, %v268
    %s288 = scalar_lea.vmem %s7, 2
    %v289 = vld [vmem:[%s288] sm:$0x1]
    %v291 = vlaneseq
    %v292 = vshrl.u32 %v291, 7
    %v293 = vsub.s32 0, %v292
    %v294 = vrot.slane %v289, %v293
    %v312 = vunpack.c.l.b16 %v271
    %v313 = vunpack.c.l.b16 %v272
    %v314 = vunpack.c.l.b16 %v273
    %v315 = vunpack.c.l.b16 %v274
    %v316 = vunpack.c.l.b16 %v275
    %v317 = vunpack.c.l.b16 %v276
    %v318 = vunpack.c.l.b16 %v277
    %v319 = vunpack.c.l.b16 %v278
    %v320 = vunpack.c.l.b16 %v279
    %v321 = vunpack.c.l.b16 %v280
    %v322 = vunpack.c.l.b16 %v281
    %v323 = vunpack.c.l.b16 %v282
    %v324 = vunpack.c.l.b16 %v283
    %v325 = vunpack.c.l.b16 %v284
    %v326 = vunpack.c.l.b16 %v285
    %v327 = vunpack.c.l.b16 %v286
    %v328 = vpack.c.b16 %v313, %v312
    %v329 = vpack.c.b16 %v315, %v314
    %v330 = vpack.c.b16 %v317, %v316
    %v331 = vpack.c.b16 %v319, %v318
    %v332 = vpack.c.b16 %v321, %v320
    %v333 = vpack.c.b16 %v323, %v322
    %v334 = vpack.c.b16 %v325, %v324
    %v335 = vpack.c.b16 %v327, %v326
    %344 = vmatprep.subr.bf16.mxu0 0
    %345 = vmatpush1.bf16.msra.mxu0 %v328
    %346 = vmatprep.subr.bf16.mxu0 0
    %347 = vmatpush1.bf16.msra.mxu0 %v329
    %348 = vmatprep.subr.bf16.mxu0 0
    %349 = vmatpush1.bf16.msra.mxu0 %v330
    %350 = vmatprep.subr.bf16.mxu0 0
    %351 = vmatpush1.bf16.msra.mxu0 %v331
    %352 = vmatprep.subr.bf16.mxu0 0
    %353 = vmatpush1.bf16.msra.mxu0 %v332
    %354 = vmatprep.subr.bf16.mxu0 0
    %355 = vmatpush1.bf16.msra.mxu0 %v333
    %356 = vmatprep.subr.bf16.mxu0 0
    %357 = vmatpush1.bf16.msra.mxu0 %v334
    %358 = vmatprep.subr.bf16.mxu0 0
    %359 = vmatpush1.bf16.msra.mxu0 %v335
    %360 = vmatprep.subr.bf16.mxu0 0
    %361 = vmatpush1.bf16.msra.mxu0 0
    %362 = vmatprep.subr.bf16.mxu0 0
    %363 = vmatpush1.bf16.msra.mxu0 0
    %364 = vmatprep.subr.bf16.mxu0 0
    %365 = vmatpush1.bf16.msra.mxu0 0
    %366 = vmatprep.subr.bf16.mxu0 0
    %367 = vmatpush1.bf16.msra.mxu0 0
    %368 = vmatprep.subr.bf16.mxu0 0
    %369 = vmatpush1.bf16.msra.mxu0 0
    %370 = vmatprep.subr.bf16.mxu0 0
    %371 = vmatpush1.bf16.msra.mxu0 0
    %372 = vmatprep.subr.bf16.mxu0 0
    %373 = vmatpush1.bf16.msra.mxu0 0
    %374 = vmatprep.subr.bf16.mxu0 0
    %375 = vmatpush1.bf16.msra.mxu0 0
    %376 = vmatprep.mubr.bf16.mxu0 0
    %377 = vmatmul.mubr.bf16.gmra.mrb[0].mxu0 %v287
    %v378 = vpop.f32.mrb[0].mxu0
    %v379 = vadd.f32 %v294, %v378
    %v380 = vpop.f32.mrb[0].mxu0
    %v381 = vpop.f32.mrb[0].mxu0
    %v382 = vadd.f32 %v294, %v381
    %v383 = vpop.f32.mrb[0].mxu0
    %384 = vdwg.mxu0
    %v385 = vld [vmem:[%s5] sm:$0xf]
    %v386 = vld [vmem:[%s5 + $0x4] sm:$0xf]
    %v387 = vld [vmem:[%s5 + $0x8] sm:$0xf]
    %v388 = vld [vmem:[%s5 + $0xc] sm:$0xf]
    %v389 = vld [vmem:[%s5 + $0x10] sm:$0xf]
    %v390 = vld [vmem:[%s5 + $0x14] sm:$0xf]
    %v391 = vld [vmem:[%s5 + $0x18] sm:$0xf]
    %v392 = vld [vmem:[%s5 + $0x1c] sm:$0xf]
    %v393 = vld [vmem:[%s5 + $0x20] sm:$0xf]
    %v394 = vld [vmem:[%s5 + $0x24] sm:$0xf]
    %v395 = vld [vmem:[%s5 + $0x28] sm:$0xf]
    %v396 = vld [vmem:[%s5 + $0x2c] sm:$0xf]
    %v397 = vld [vmem:[%s5 + $0x30] sm:$0xf]
    %v398 = vld [vmem:[%s5 + $0x34] sm:$0xf]
    %v399 = vld [vmem:[%s5 + $0x38] sm:$0xf]
    %v400 = vld [vmem:[%s5 + $0x3c] sm:$0xf]
    %v401 = vpack.c.bf16 %v382, %v379
    %v402 = vld [vmem:[%s8] sm:$0x1]
    %v404 = vlaneseq
    %v405 = vshrl.u32 %v404, 7
    %v406 = vsub.s32 0, %v405
    %v407 = vrot.slane %v402, %v406
    %v425 = vunpack.c.l.b16 %v385
    %v426 = vunpack.c.l.b16 %v386
    %v427 = vunpack.c.l.b16 %v387
    %v428 = vunpack.c.l.b16 %v388
    %v429 = vunpack.c.l.b16 %v389
    %v430 = vunpack.c.l.b16 %v390
    %v431 = vunpack.c.l.b16 %v391
    %v432 = vunpack.c.l.b16 %v392
    %v433 = vunpack.c.l.b16 %v393
    %v434 = vunpack.c.l.b16 %v394
    %v435 = vunpack.c.l.b16 %v395
    %v436 = vunpack.c.l.b16 %v396
    %v437 = vunpack.c.l.b16 %v397
    %v438 = vunpack.c.l.b16 %v398
    %v439 = vunpack.c.l.b16 %v399
    %v440 = vunpack.c.l.b16 %v400
    %v441 = vpack.c.b16 %v426, %v425
    %v442 = vpack.c.b16 %v428, %v427
    %v443 = vpack.c.b16 %v430, %v429
    %v444 = vpack.c.b16 %v432, %v431
    %v445 = vpack.c.b16 %v434, %v433
    %v446 = vpack.c.b16 %v436, %v435
    %v447 = vpack.c.b16 %v438, %v437
    %v448 = vpack.c.b16 %v440, %v439
    %457 = vmatprep.subr.bf16.mxu0 0
    %458 = vmatpush1.bf16.msra.mxu0 %v441
    %459 = vmatprep.subr.bf16.mxu0 0
    %460 = vmatpush1.bf16.msra.mxu0 %v442
    %461 = vmatprep.subr.bf16.mxu0 0
    %462 = vmatpush1.bf16.msra.mxu0 %v443
    %463 = vmatprep.subr.bf16.mxu0 0
    %464 = vmatpush1.bf16.msra.mxu0 %v444
    %465 = vmatprep.subr.bf16.mxu0 0
    %466 = vmatpush1.bf16.msra.mxu0 %v445
    %467 = vmatprep.subr.bf16.mxu0 0
    %468 = vmatpush1.bf16.msra.mxu0 %v446
    %469 = vmatprep.subr.bf16.mxu0 0
    %470 = vmatpush1.bf16.msra.mxu0 %v447
    %471 = vmatprep.subr.bf16.mxu0 0
    %472 = vmatpush1.bf16.msra.mxu0 %v448
    %473 = vmatprep.subr.bf16.mxu0 0
    %474 = vmatpush1.bf16.msra.mxu0 0
    %475 = vmatprep.subr.bf16.mxu0 0
    %476 = vmatpush1.bf16.msra.mxu0 0
    %477 = vmatprep.subr.bf16.mxu0 0
    %478 = vmatpush1.bf16.msra.mxu0 0
    %479 = vmatprep.subr.bf16.mxu0 0
    %480 = vmatpush1.bf16.msra.mxu0 0
    %481 = vmatprep.subr.bf16.mxu0 0
    %482 = vmatpush1.bf16.msra.mxu0 0
    %483 = vmatprep.subr.bf16.mxu0 0
    %484 = vmatpush1.bf16.msra.mxu0 0
    %485 = vmatprep.subr.bf16.mxu0 0
    %486 = vmatpush1.bf16.msra.mxu0 0
    %487 = vmatprep.subr.bf16.mxu0 0
    %488 = vmatpush1.bf16.msra.mxu0 0
    %489 = vmatprep.mubr.bf16.mxu0 0
    %490 = vmatmul.mubr.bf16.gmra.mrb[0].mxu0 %v401
    %v491 = vpop.f32.mrb[0].mxu0
    %v492 = vadd.f32 %v407, %v491
    %v493 = vpop.f32.mrb[0].mxu0
    %v494 = vpop.f32.mrb[0].mxu0
    %v495 = vadd.f32 %v407, %v494
    %v496 = vpop.f32.mrb[0].mxu0
    %497 = vdwg.mxu0
    %s498 = scalar_lea.vmem %s5, 64
    %v499 = vld [vmem:[%s498] sm:$0xf]
    %v500 = vld [vmem:[%s498 + $0x4] sm:$0xf]
    %v501 = vld [vmem:[%s498 + $0x8] sm:$0xf]
    %v502 = vld [vmem:[%s498 + $0xc] sm:$0xf]
    %v503 = vld [vmem:[%s498 + $0x10] sm:$0xf]
    %v504 = vld [vmem:[%s498 + $0x14] sm:$0xf]
    %v505 = vld [vmem:[%s498 + $0x18] sm:$0xf]
    %v506 = vld [vmem:[%s498 + $0x1c] sm:$0xf]
    %v507 = vld [vmem:[%s498 + $0x20] sm:$0xf]
    %v508 = vld [vmem:[%s498 + $0x24] sm:$0xf]
    %v509 = vld [vmem:[%s498 + $0x28] sm:$0xf]
    %v510 = vld [vmem:[%s498 + $0x2c] sm:$0xf]
    %v511 = vld [vmem:[%s498 + $0x30] sm:$0xf]
    %v512 = vld [vmem:[%s498 + $0x34] sm:$0xf]
    %v513 = vld [vmem:[%s498 + $0x38] sm:$0xf]
    %v514 = vld [vmem:[%s498 + $0x3c] sm:$0xf]
    %s515 = scalar_lea.vmem %s8, 1
    %v516 = vld [vmem:[%s515] sm:$0x1]
    %v518 = vlaneseq
    %v519 = vshrl.u32 %v518, 7
    %v520 = vsub.s32 0, %v519
    %v521 = vrot.slane %v516, %v520
    %v539 = vunpack.c.l.b16 %v499
    %v540 = vunpack.c.l.b16 %v500
    %v541 = vunpack.c.l.b16 %v501
    %v542 = vunpack.c.l.b16 %v502
    %v543 = vunpack.c.l.b16 %v503
    %v544 = vunpack.c.l.b16 %v504
    %v545 = vunpack.c.l.b16 %v505
    %v546 = vunpack.c.l.b16 %v506
    %v547 = vunpack.c.l.b16 %v507
    %v548 = vunpack.c.l.b16 %v508
    %v549 = vunpack.c.l.b16 %v509
    %v550 = vunpack.c.l.b16 %v510
    %v551 = vunpack.c.l.b16 %v511
    %v552 = vunpack.c.l.b16 %v512
    %v553 = vunpack.c.l.b16 %v513
    %v554 = vunpack.c.l.b16 %v514
    %v555 = vpack.c.b16 %v540, %v539
    %v556 = vpack.c.b16 %v542, %v541
    %v557 = vpack.c.b16 %v544, %v543
    %v558 = vpack.c.b16 %v546, %v545
    %v559 = vpack.c.b16 %v548, %v547
    %v560 = vpack.c.b16 %v550, %v549
    %v561 = vpack.c.b16 %v552, %v551
    %v562 = vpack.c.b16 %v554, %v553
    %571 = vmatprep.subr.bf16.mxu0 0
    %572 = vmatpush1.bf16.msra.mxu0 %v555
    %573 = vmatprep.subr.bf16.mxu0 0
    %574 = vmatpush1.bf16.msra.mxu0 %v556
    %575 = vmatprep.subr.bf16.mxu0 0
    %576 = vmatpush1.bf16.msra.mxu0 %v557
    %577 = vmatprep.subr.bf16.mxu0 0
    %578 = vmatpush1.bf16.msra.mxu0 %v558
    %579 = vmatprep.subr.bf16.mxu0 0
    %580 = vmatpush1.bf16.msra.mxu0 %v559
    %581 = vmatprep.subr.bf16.mxu0 0
    %582 = vmatpush1.bf16.msra.mxu0 %v560
    %583 = vmatprep.subr.bf16.mxu0 0
    %584 = vmatpush1.bf16.msra.mxu0 %v561
    %585 = vmatprep.subr.bf16.mxu0 0
    %586 = vmatpush1.bf16.msra.mxu0 %v562
    %587 = vmatprep.subr.bf16.mxu0 0
    %588 = vmatpush1.bf16.msra.mxu0 0
    %589 = vmatprep.subr.bf16.mxu0 0
    %590 = vmatpush1.bf16.msra.mxu0 0
    %591 = vmatprep.subr.bf16.mxu0 0
    %592 = vmatpush1.bf16.msra.mxu0 0
    %593 = vmatprep.subr.bf16.mxu0 0
    %594 = vmatpush1.bf16.msra.mxu0 0
    %595 = vmatprep.subr.bf16.mxu0 0
    %596 = vmatpush1.bf16.msra.mxu0 0
    %597 = vmatprep.subr.bf16.mxu0 0
    %598 = vmatpush1.bf16.msra.mxu0 0
    %599 = vmatprep.subr.bf16.mxu0 0
    %600 = vmatpush1.bf16.msra.mxu0 0
    %601 = vmatprep.subr.bf16.mxu0 0
    %602 = vmatpush1.bf16.msra.mxu0 0
    %603 = vmatprep.mubr.bf16.mxu0 0
    %604 = vmatmul.mubr.bf16.gmra.mrb[0].mxu0 %v401
    %v605 = vpop.f32.mrb[0].mxu0
    %v606 = vadd.f32 %v521, %v605
    %v607 = vpop.f32.mrb[0].mxu0
    %v608 = vpop.f32.mrb[0].mxu0
    %v609 = vadd.f32 %v521, %v608
    %v610 = vpop.f32.mrb[0].mxu0
    %611 = vdwg.mxu0
    %v612 = vld [vmem:[%s1] sm:$0xff]
    %v613 = vld [vmem:[%s1 + $0x8] sm:$0xff]
    %v614 = vmul.f32 %v606, 0.5
    %v615 = vmul.f32 %v609, 0.5
    %v616 = vmul.f32 %v614, 1.442695
    %v617 = vpow.pop %v616
    %v618 = vmul.f32 %v615, 1.442695
    %v619 = vpow.pop %v618
    %v620 = vmul.f32 %v612, %v617
    %v621 = vmul.f32 %v613, %v619
    %v622 = vadd.f32 %v492, %v620
    %v623 = vadd.f32 %v495, %v621
    %v624 = vld [vmem:[%s4] sm:$0xf]
    %v625 = vld [vmem:[%s4 + $0x4] sm:$0xf]
    %v626 = vpack.c.bf16 %v623, %v622
    %s627 = scalar_lea.vmem %s7, 3
    %v628 = vld [vmem:[%s627] sm:$0x1]
    %v630 = vlaneseq
    %v631 = vshrl.u32 %v630, 7
    %v632 = vsub.s32 0, %v631
    %v633 = vrot.slane %v628, %v632
    %v637 = vunpack.c.l.b16 %v624
    %v638 = vunpack.c.l.b16 %v625
    %v639 = vpack.c.b16 %v638, %v637
    %v642 = vsel %vm66, %v626, 0
    %644 = vmatprep.subr.bf16.mxu0 0
    %645 = vmatpush1.bf16.msra.mxu0 %v639
    %646 = vmatprep.subr.bf16.mxu0 0
    %647 = vmatpush1.bf16.msra.mxu0 0
    %648 = vmatprep.subr.bf16.mxu0 0
    %649 = vmatpush1.bf16.msra.mxu0 0
    %650 = vmatprep.subr.bf16.mxu0 0
    %651 = vmatpush1.bf16.msra.mxu0 0
    %652 = vmatprep.subr.bf16.mxu0 0
    %653 = vmatpush1.bf16.msra.mxu0 0
    %654 = vmatprep.subr.bf16.mxu0 0
    %655 = vmatpush1.bf16.msra.mxu0 0
    %656 = vmatprep.subr.bf16.mxu0 0
    %657 = vmatpush1.bf16.msra.mxu0 0
    %658 = vmatprep.subr.bf16.mxu0 0
    %659 = vmatpush1.bf16.msra.mxu0 0
    %660 = vmatprep.subr.bf16.mxu0 0
    %661 = vmatpush1.bf16.msra.mxu0 0
    %662 = vmatprep.subr.bf16.mxu0 0
    %663 = vmatpush1.bf16.msra.mxu0 0
    %664 = vmatprep.subr.bf16.mxu0 0
    %665 = vmatpush1.bf16.msra.mxu0 0
    %666 = vmatprep.subr.bf16.mxu0 0
    %667 = vmatpush1.bf16.msra.mxu0 0
    %668 = vmatprep.subr.bf16.mxu0 0
    %669 = vmatpush1.bf16.msra.mxu0 0
    %670 = vmatprep.subr.bf16.mxu0 0
    %671 = vmatpush1.bf16.msra.mxu0 0
    %672 = vmatprep.subr.bf16.mxu0 0
    %673 = vmatpush1.bf16.msra.mxu0 0
    %674 = vmatprep.subr.bf16.mxu0 0
    %675 = vmatpush1.bf16.msra.mxu0 0
    %676 = vmatprep.mubr.bf16.mxu0 0
    %677 = vmatmul.mubr.bf16.gmra.mrb[0].mxu0 %v642
    %v678 = vpop.f32.mrb[0].mxu0
    %v679 = vadd.f32 %v633, %v678
    %v680 = vpop.f32.mrb[0].mxu0
    %v681 = vpop.f32.mrb[0].mxu0
    %v682 = vadd.f32 %v633, %v681
    %v683 = vpop.f32.mrb[0].mxu0
    %684 = vdwg.mxu0
    %v685 = vmul.f32 %v679, 0.01
    %v686 = vmul.f32 %v682, 0.01
    %v687 = vmax.f32 %v679, %v685
    %v688 = vmax.f32 %v682, %v686
    %s689 = scalar_lea.vmem [#allocation2], 128
    %v690 = vld [vmem:[%s689] sm:$0xf]
    %v691 = vld [vmem:[%s689 + $0x4] sm:$0xf]
    %v692 = vld [vmem:[%s689 + $0x8] sm:$0xf]
    %v693 = vld [vmem:[%s689 + $0xc] sm:$0xf]
    %v694 = vld [vmem:[%s689 + $0x10] sm:$0xf]
    %v695 = vld [vmem:[%s689 + $0x14] sm:$0xf]
    %v696 = vld [vmem:[%s689 + $0x18] sm:$0xf]
    %v697 = vld [vmem:[%s689 + $0x1c] sm:$0xf]
    %v698 = vld [vmem:[%s689 + $0x20] sm:$0xf]
    %v699 = vld [vmem:[%s689 + $0x24] sm:$0xf]
    %v700 = vld [vmem:[%s689 + $0x28] sm:$0xf]
    %v701 = vld [vmem:[%s689 + $0x2c] sm:$0xf]
    %v702 = vld [vmem:[%s689 + $0x30] sm:$0xf]
    %v703 = vld [vmem:[%s689 + $0x34] sm:$0xf]
    %v704 = vld [vmem:[%s689 + $0x38] sm:$0xf]
    %v705 = vld [vmem:[%s689 + $0x3c] sm:$0xf]
    %v706 = vpack.c.bf16 %v688, %v687
    %s707 = scalar_lea.vmem %s7, 4
    %v708 = vld [vmem:[%s707] sm:$0x1]
    %v710 = vlaneseq
    %v711 = vshrl.u32 %v710, 7
    %v712 = vsub.s32 0, %v711
    %v713 = vrot.slane %v708, %v712
    %v731 = vunpack.c.l.b16 %v690
    %v732 = vunpack.c.l.b16 %v691
    %v733 = vunpack.c.l.b16 %v692
    %v734 = vunpack.c.l.b16 %v693
    %v735 = vunpack.c.l.b16 %v694
    %v736 = vunpack.c.l.b16 %v695
    %v737 = vunpack.c.l.b16 %v696
    %v738 = vunpack.c.l.b16 %v697
    %v739 = vunpack.c.l.b16 %v698
    %v740 = vunpack.c.l.b16 %v699
    %v741 = vunpack.c.l.b16 %v700
    %v742 = vunpack.c.l.b16 %v701
    %v743 = vunpack.c.l.b16 %v702
    %v744 = vunpack.c.l.b16 %v703
    %v745 = vunpack.c.l.b16 %v704
    %v746 = vunpack.c.l.b16 %v705
    %v747 = vpack.c.b16 %v732, %v731
    %v748 = vpack.c.b16 %v734, %v733
    %v749 = vpack.c.b16 %v736, %v735
    %v750 = vpack.c.b16 %v738, %v737
    %v751 = vpack.c.b16 %v740, %v739
    %v752 = vpack.c.b16 %v742, %v741
    %v753 = vpack.c.b16 %v744, %v743
    %v754 = vpack.c.b16 %v746, %v745
    %763 = vmatprep.subr.bf16.mxu0 0
    %764 = vmatpush1.bf16.msra.mxu0 %v747
    %765 = vmatprep.subr.bf16.mxu0 0
    %766 = vmatpush1.bf16.msra.mxu0 %v748
    %767 = vmatprep.subr.bf16.mxu0 0
    %768 = vmatpush1.bf16.msra.mxu0 %v749
    %769 = vmatprep.subr.bf16.mxu0 0
    %770 = vmatpush1.bf16.msra.mxu0 %v750
    %771 = vmatprep.subr.bf16.mxu0 0
    %772 = vmatpush1.bf16.msra.mxu0 %v751
    %773 = vmatprep.subr.bf16.mxu0 0
    %774 = vmatpush1.bf16.msra.mxu0 %v752
    %775 = vmatprep.subr.bf16.mxu0 0
    %776 = vmatpush1.bf16.msra.mxu0 %v753
    %777 = vmatprep.subr.bf16.mxu0 0
    %778 = vmatpush1.bf16.msra.mxu0 %v754
    %779 = vmatprep.subr.bf16.mxu0 0
    %780 = vmatpush1.bf16.msra.mxu0 0
    %781 = vmatprep.subr.bf16.mxu0 0
    %782 = vmatpush1.bf16.msra.mxu0 0
    %783 = vmatprep.subr.bf16.mxu0 0
    %784 = vmatpush1.bf16.msra.mxu0 0
    %785 = vmatprep.subr.bf16.mxu0 0
    %786 = vmatpush1.bf16.msra.mxu0 0
    %787 = vmatprep.subr.bf16.mxu0 0
    %788 = vmatpush1.bf16.msra.mxu0 0
    %789 = vmatprep.subr.bf16.mxu0 0
    %790 = vmatpush1.bf16.msra.mxu0 0
    %791 = vmatprep.subr.bf16.mxu0 0
    %792 = vmatpush1.bf16.msra.mxu0 0
    %793 = vmatprep.subr.bf16.mxu0 0
    %794 = vmatpush1.bf16.msra.mxu0 0
    %795 = vmatprep.mubr.bf16.mxu0 0
    %796 = vmatmul.mubr.bf16.gmra.mrb[0].mxu0 %v706
    %v797 = vpop.f32.mrb[0].mxu0
    %v798 = vadd.f32 %v713, %v797
    %v799 = vpop.f32.mrb[0].mxu0
    %v800 = vpop.f32.mrb[0].mxu0
    %v801 = vadd.f32 %v713, %v800
    %v802 = vpop.f32.mrb[0].mxu0
    %803 = vdwg.mxu0
    %v804 = vmul.f32 %v798, 0.01
    %v805 = vmul.f32 %v801, 0.01
    %v806 = vmax.f32 %v798, %v804
    %v807 = vmax.f32 %v801, %v805
    %v808 = vld [vmem:[%s6] sm:$0xf]
    %v809 = vld [vmem:[%s6 + $0x4] sm:$0xf]
    %v810 = vld [vmem:[%s6 + $0x8] sm:$0xf]
    %v811 = vld [vmem:[%s6 + $0xc] sm:$0xf]
    %v812 = vld [vmem:[%s6 + $0x10] sm:$0xf]
    %v813 = vld [vmem:[%s6 + $0x14] sm:$0xf]
    %v814 = vld [vmem:[%s6 + $0x18] sm:$0xf]
    %v815 = vld [vmem:[%s6 + $0x1c] sm:$0xf]
    %v816 = vld [vmem:[%s6 + $0x20] sm:$0xf]
    %v817 = vld [vmem:[%s6 + $0x24] sm:$0xf]
    %v818 = vld [vmem:[%s6 + $0x28] sm:$0xf]
    %v819 = vld [vmem:[%s6 + $0x2c] sm:$0xf]
    %v820 = vld [vmem:[%s6 + $0x30] sm:$0xf]
    %v821 = vld [vmem:[%s6 + $0x34] sm:$0xf]
    %v822 = vld [vmem:[%s6 + $0x38] sm:$0xf]
    %v823 = vld [vmem:[%s6 + $0x3c] sm:$0xf]
    %v824 = vpack.c.bf16 %v807, %v806
    %v825 = vld [vmem:[%s9] sm:$0x1]
    %v827 = vlaneseq
    %v828 = vshrl.u32 %v827, 7
    %v829 = vsub.s32 0, %v828
    %v830 = vrot.slane %v825, %v829
    %v848 = vunpack.c.l.b16 %v808
    %v849 = vunpack.c.l.b16 %v809
    %v850 = vunpack.c.l.b16 %v810
    %v851 = vunpack.c.l.b16 %v811
    %v852 = vunpack.c.l.b16 %v812
    %v853 = vunpack.c.l.b16 %v813
    %v854 = vunpack.c.l.b16 %v814
    %v855 = vunpack.c.l.b16 %v815
    %v856 = vunpack.c.l.b16 %v816
    %v857 = vunpack.c.l.b16 %v817
    %v858 = vunpack.c.l.b16 %v818
    %v859 = vunpack.c.l.b16 %v819
    %v860 = vunpack.c.l.b16 %v820
    %v861 = vunpack.c.l.b16 %v821
    %v862 = vunpack.c.l.b16 %v822
    %v863 = vunpack.c.l.b16 %v823
    %v864 = vpack.c.b16 %v849, %v848
    %v865 = vpack.c.b16 %v851, %v850
    %v866 = vpack.c.b16 %v853, %v852
    %v867 = vpack.c.b16 %v855, %v854
    %v868 = vpack.c.b16 %v857, %v856
    %v869 = vpack.c.b16 %v859, %v858
    %v870 = vpack.c.b16 %v861, %v860
    %v871 = vpack.c.b16 %v863, %v862
    %880 = vmatprep.subr.bf16.mxu0 0
    %881 = vmatpush1.bf16.msra.mxu0 %v864
    %882 = vmatprep.subr.bf16.mxu0 0
    %883 = vmatpush1.bf16.msra.mxu0 %v865
    %884 = vmatprep.subr.bf16.mxu0 0
    %885 = vmatpush1.bf16.msra.mxu0 %v866
    %886 = vmatprep.subr.bf16.mxu0 0
    %887 = vmatpush1.bf16.msra.mxu0 %v867
    %888 = vmatprep.subr.bf16.mxu0 0
    %889 = vmatpush1.bf16.msra.mxu0 %v868
    %890 = vmatprep.subr.bf16.mxu0 0
    %891 = vmatpush1.bf16.msra.mxu0 %v869
    %892 = vmatprep.subr.bf16.mxu0 0
    %893 = vmatpush1.bf16.msra.mxu0 %v870
    %894 = vmatprep.subr.bf16.mxu0 0
    %895 = vmatpush1.bf16.msra.mxu0 %v871
    %896 = vmatprep.subr.bf16.mxu0 0
    %897 = vmatpush1.bf16.msra.mxu0 0
    %898 = vmatprep.subr.bf16.mxu0 0
    %899 = vmatpush1.bf16.msra.mxu0 0
    %900 = vmatprep.subr.bf16.mxu0 0
    %901 = vmatpush1.bf16.msra.mxu0 0
    %902 = vmatprep.subr.bf16.mxu0 0
    %903 = vmatpush1.bf16.msra.mxu0 0
    %904 = vmatprep.subr.bf16.mxu0 0
    %905 = vmatpush1.bf16.msra.mxu0 0
    %906 = vmatprep.subr.bf16.mxu0 0
    %907 = vmatpush1.bf16.msra.mxu0 0
    %908 = vmatprep.subr.bf16.mxu0 0
    %909 = vmatpush1.bf16.msra.mxu0 0
    %910 = vmatprep.subr.bf16.mxu0 0
    %911 = vmatpush1.bf16.msra.mxu0 0
    %912 = vmatprep.mubr.bf16.mxu0 0
    %913 = vmatmul.mubr.bf16.gmra.mrb[0].mxu0 %v824
    %v914 = vpop.f32.mrb[0].mxu0
    %v915 = vadd.f32 %v830, %v914
    %v916 = vpop.f32.mrb[0].mxu0
    %v917 = vpop.f32.mrb[0].mxu0
    %v918 = vadd.f32 %v830, %v917
    %v919 = vpop.f32.mrb[0].mxu0
    %920 = vdwg.mxu0
    %921 = vst [vmem:[#allocation5] sm:$0xff] %v915
    %922 = vst [vmem:[#allocation5 + $0x8] sm:$0xff] %v918
    %923 = vst.msk [vmem:[#allocation6] sm:$0xff] %vm66, %v492
    %924 = vst.msk [vmem:[#allocation6 + $0x8] sm:$0xff] %vm66, %v495
    %925 = vst.msk [vmem:[#allocation8] sm:$0xff] %vm66, %v606
    %926 = vst.msk [vmem:[#allocation8 + $0x8] sm:$0xff] %vm66, %v609
    // Predicated region
    $region46: #{tpu_custom_call.1} parent=1 // pred_check
      _
    $region47: #{tpu_custom_call.1} parent=1 // pred_check_branch
      %928 = sbr.rel (0) target = $region49
    $region48: #{tpu_custom_call.1} parent=1 // pred_region
      %s930 = ssub.s32 256, 256
      %931 = vsyncadd [#allocation4], %s930
      %s932 = sshll.u32 [#allocation5], 4
      %s933 = int_to_ptr.vmem [resolvable:$true] %s932
      %938 = dma.vmem_to_hbm [thread:$0]  %s933, 256, %s10, [#allocation4], 128, 128, 8
    $region49: #{tpu_custom_call.1} parent=1 // pred_fallthru
      _
    // Predicated region
    $region50: #{tpu_custom_call.1} parent=1 // pred_check
      _
    $region51: #{tpu_custom_call.1} parent=1 // pred_check_branch
      %940 = sbr.rel (0) target = $region53
    $region52: #{tpu_custom_call.1} parent=1 // pred_region
      %s942 = ssub.s32 256, 256
      %943 = vsyncadd [#allocation7], %s942
      %s944 = sshll.u32 [#allocation6], 4
      %s945 = int_to_ptr.vmem [resolvable:$true] %s944
      %950 = dma.vmem_to_hbm [thread:$0]  %s945, 256, %s11, [#allocation7], 128, 128, 8
    $region53: #{tpu_custom_call.1} parent=1 // pred_fallthru
      _
    // Predicated region
    $region54: #{tpu_custom_call.1} parent=1 // pred_check
      _
    $region55: #{tpu_custom_call.1} parent=1 // pred_check_branch
      %952 = sbr.rel (0) target = $region57
    $region56: #{tpu_custom_call.1} parent=1 // pred_region
      %s954 = ssub.s32 256, 256
      %955 = vsyncadd [#allocation7], %s954
      %s956 = sshll.u32 [#allocation8], 4
      %s957 = int_to_ptr.vmem [resolvable:$true] %s956
      %962 = dma.vmem_to_hbm [thread:$0]  %s957, 256, %s12, [#allocation7], 128, 128, 8
    $region57: #{tpu_custom_call.1} parent=1 // pred_fallthru
      _
    // Predicated region
    $region58: #{tpu_custom_call.1} parent=1 // pred_check
      _
    $region59: #{tpu_custom_call.1} parent=1 // pred_check_branch
      %964 = sbr.rel (0) target = $region61
    $region60: #{tpu_custom_call.1} parent=1 // pred_region
      %965 = dma.done [#allocation4], 256
    $region61: #{tpu_custom_call.1} parent=1 // pred_fallthru
      _
    // Predicated region
    $region62: #{tpu_custom_call.1} parent=1 // pred_check
      _
    $region63: #{tpu_custom_call.1} parent=1 // pred_check_branch
      %967 = sbr.rel (0) target = $region65
    $region64: #{tpu_custom_call.1} parent=1 // pred_region
      %968 = dma.done [#allocation7], 256
    $region65: #{tpu_custom_call.1} parent=1 // pred_fallthru
      _
    // Predicated region
    $region66: #{tpu_custom_call.1} parent=1 // pred_check
      _
    $region67: #{tpu_custom_call.1} parent=1 // pred_check_branch
      %970 = sbr.rel (0) target = $region69
    $region68: #{tpu_custom_call.1} parent=1 // pred_region
      %971 = dma.done [#allocation7], 256
    $region69: #{tpu_custom_call.1} parent=1 // pred_fallthru
      _
    %972 = vsyncpa [#allocation3], 1
    %973 = vsyncpa [#allocation4], 1
    %974 = vsyncpa [#allocation7], 1

// kernel: tpu_custom_call.1
$region0: #{tpu_custom_call.1}
  #allocation0 [shape = 'u32[]', space=smem, size = 0x4, offset = 0x4, fixed_abs, tag = 'smem constant byte address 0x4 - core index']
  #allocation1 [shape = 'u32[144,128]{1,0:T(1,128)}', space=vmem, size = 0x12000, scoped, tag = 'internal scratch']
  %s0 = inlined_call_operand.vmem [shape: f32[16,16], index: 0, kind: input, shape index: {}]
  %s1 = inlined_call_operand.vmem [shape: f32[16,16], index: 1, kind: input, shape index: {}]
  %s2 = inlined_call_operand.vmem [shape: f32[16,128], index: 2, kind: input, shape index: {}]
  %s3 = inlined_call_operand.hbm [shape: bf16[3,128,128], index: 3, kind: input, shape index: {}]
  %s4 = inlined_call_operand.vmem [shape: bf16[16,128], index: 4, kind: input, shape index: {}]
  %s5 = inlined_call_operand.vmem [shape: bf16[2,128,16], index: 5, kind: input, shape index: {}]
  %s6 = inlined_call_operand.vmem [shape: bf16[128,128], index: 6, kind: input, shape index: {}]
  %s7 = inlined_call_operand.vmem [shape: f32[5,1,128], index: 7, kind: input, shape index: {}]
  %s8 = inlined_call_operand.vmem [shape: f32[2,1,16], index: 8, kind: input, shape index: {}]
  %s9 = inlined_call_operand.vmem [shape: f32[1,128], index: 9, kind: input, shape index: {}]
  %s10 = inlined_call_operand.hbm [shape: f32[16,128], index: 10, kind: output, shape index: {0}]
  %s11 = inlined_call_operand.hbm [shape: f32[16,16], index: 11, kind: output, shape index: {1}]
  %s12 = inlined_call_operand.hbm [shape: f32[16,16], index: 12, kind: output, shape index: {2}]
  %13 = xla_tuple %s10, %s11, %s12
  %s14 = sld [smem:[#allocation0]]
  $region70: #{tpu_custom_call.1} parent=0
    _
  %s16 = ssub.s32 1, %s14
  %s17 = scalar_select 0, %s16, %s14
  $region1: #{tpu_custom_call.1} parent=0
    #allocation2 [shape = 'u8[98304]{0}', space=vmem, size = 0x18000, scoped, tag = 'input window, operand 3, single buffered']
    #allocation3 [shape = 's32[1]{0}', space=sflag, size = 0x4, scoped, tag = 'scoped memory for tpu_custom_call.1']
    #allocation4 [shape = 's32[1]{0}', space=sflag, size = 0x4, scoped, tag = 'scoped memory for tpu_custom_call.1']
    #allocation5 [shape = 'u8[8192]{0}', space=vmem, size = 0x2000, scoped, tag = 'output window, operand 0, single buffered']
    #allocation6 [shape = 'u8[8192]{0}', space=vmem, size = 0x2000, scoped, tag = 'output window, operand 1, single buffered']
    #allocation7 [shape = 's32[1]{0}', space=sflag, size = 0x4, scoped, tag = 'scoped memory for tpu_custom_call.1']
    #allocation8 [shape = 'u8[8192]{0}', space=vmem, size = 0x2000, scoped, tag = 'output window, operand 2, single buffered']
    %18 = vsyncpa [#allocation3], 0
    %19 = vsyncpa [#allocation4], 0
    %20 = vsyncpa [#allocation7], 0
    // Predicated region
    $region2: #{tpu_custom_call.1} parent=1 // pred_check
      _
    $region3: #{tpu_custom_call.1} parent=1 // pred_check_branch
      %22 = sbr.rel (0) target = $region5
    $region4: #{tpu_custom_call.1} parent=1 // pred_region
      _
    $region5: #{tpu_custom_call.1} parent=1 // pred_fallthru
      _
    // Predicated region
    $region6: #{tpu_custom_call.1} parent=1 // pred_check
      _
    $region7: #{tpu_custom_call.1} parent=1 // pred_check_branch
      %24 = sbr.rel (0) target = $region9
    $region8: #{tpu_custom_call.1} parent=1 // pred_region
      _
    $region9: #{tpu_custom_call.1} parent=1 // pred_fallthru
      _
    // Predicated region
    $region10: #{tpu_custom_call.1} parent=1 // pred_check
      _
    $region11: #{tpu_custom_call.1} parent=1 // pred_check_branch
      %26 = sbr.rel (0) target = $region13
    $region12: #{tpu_custom_call.1} parent=1 // pred_region
      _
    $region13: #{tpu_custom_call.1} parent=1 // pred_fallthru
      _
    // Predicated region
    $region14: #{tpu_custom_call.1} parent=1 // pred_check
      _
    $region15: #{tpu_custom_call.1} parent=1 // pred_check_branch
      %28 = sbr.rel (0) target = $region17
    $region16: #{tpu_custom_call.1} parent=1 // pred_region
      %s30 = ssub.s32 3072, 3072
      %31 = vsyncadd [#allocation3], %s30
      %s32 = sshll.u32 [#allocation2], 4
      %s33 = int_to_ptr.vmem [resolvable:$true] %s32
      %38 = dma.hbm_to_vmem [thread:$0]  %s3, 3072, %s33, [#allocation3], 64, 64, 4
    $region17: #{tpu_custom_call.1} parent=1 // pred_fallthru
      _
    // Predicated region
    $region18: #{tpu_custom_call.1} parent=1 // pred_check
      _
    $region19: #{tpu_custom_call.1} parent=1 // pred_check_branch
      %40 = sbr.rel (0) target = $region21
    $region20: #{tpu_custom_call.1} parent=1 // pred_region
      _
    $region21: #{tpu_custom_call.1} parent=1 // pred_fallthru
      _
    // Predicated region
    $region22: #{tpu_custom_call.1} parent=1 // pred_check
      _
    $region23: #{tpu_custom_call.1} parent=1 // pred_check_branch
      %42 = sbr.rel (0) target = $region25
    $region24: #{tpu_custom_call.1} parent=1 // pred_region
      _
    $region25: #{tpu_custom_call.1} parent=1 // pred_fallthru
      _
    // Predicated region
    $region26: #{tpu_custom_call.1} parent=1 // pred_check
      _
    $region27: #{tpu_custom_call.1} parent=1 // pred_check_branch
      %44 = sbr.rel (0) target = $region29
    $region28: #{tpu_custom_call.1} parent=1 // pred_region
      _
    $region29: #{tpu_custom_call.1} parent=1 // pred_fallthru
      _
    // Predicated region
    $region30: #{tpu_custom_call.1} parent=1 // pred_check
      _
    $region31: #{tpu_custom_call.1} parent=1 // pred_check_branch
      %46 = sbr.rel (0) target = $region33
    $region32: #{tpu_custom_call.1} parent=1 // pred_region
      _
    $region33: #{tpu_custom_call.1} parent=1 // pred_fallthru
      _
    // Predicated region
    $region34: #{tpu_custom_call.1} parent=1 // pred_check
      _
    $region35: #{tpu_custom_call.1} parent=1 // pred_check_branch
      %48 = sbr.rel (0) target = $region37
    $region36: #{tpu_custom_call.1} parent=1 // pred_region
      _
    $region37: #{tpu_custom_call.1} parent=1 // pred_fallthru
      _
    // Predicated region
    $region38: #{tpu_custom_call.1} parent=1 // pred_check
      _
    $region39: #{tpu_custom_call.1} parent=1 // pred_check_branch
      %50 = sbr.rel (0) target = $region41
    $region40: #{tpu_custom_call.1} parent=1 // pred_region
      _
    $region41: #{tpu_custom_call.1} parent=1 // pred_fallthru
      _
    // Predicated region
    $region42: #{tpu_custom_call.1} parent=1 // pred_check
      _
    $region43: #{tpu_custom_call.1} parent=1 // pred_check_branch
      %52 = sbr.rel (0) target = $region45
    $region44: #{tpu_custom_call.1} parent=1 // pred_region
      %53 = dma.done [#allocation3], 3072
    $region45: #{tpu_custom_call.1} parent=1 // pred_fallthru
      _
    %v55 = vld [vmem:[%s0] sm:$0xff]
    %v56 = vld [vmem:[%s0 + $0x8] sm:$0xff]
    %v57 = vld [vmem:[%s2] sm:$0xff]
    %v58 = vld [vmem:[%s2 + $0x8] sm:$0xff]
    %v59 = vld [vmem:[%s7] sm:$0x1]
    %v61 = vlaneseq
    %v62 = vshrl.u32 %v61, 7
    %v63 = vsub.s32 0, %v62
    %v64 = vrot.slane %v59, %v63
    %vm66 = vcmask 130048
    %v68 = vsel %vm66, %v55, 0
    %v71 = vsel %vm66, %v56, 0
    %73 = vmatprep.subr.mxu0 0.0
    %74 = vmatpush1.msra.mxu0 %v57
    %75 = vmatprep.subr.mxu0 0.0
    %76 = vmatpush1.msra.mxu0 %v58
    %77 = vmatprep.subr.mxu0 0.0
    %78 = vmatpush1.msra.mxu0 0.0
    %79 = vmatprep.subr.mxu0 0.0
    %80 = vmatpush1.msra.mxu0 0.0
    %81 = vmatprep.subr.mxu0 0.0
    %82 = vmatpush1.msra.mxu0 0.0
    %83 = vmatprep.subr.mxu0 0.0
    %84 = vmatpush1.msra.mxu0 0.0
    %85 = vmatprep.subr.mxu0 0.0
    %86 = vmatpush1.msra.mxu0 0.0
    %87 = vmatprep.subr.mxu0 0.0
    %88 = vmatpush1.msra.mxu0 0.0
    %89 = vmatprep.subr.mxu0 0.0
    %90 = vmatpush1.msra.mxu0 0.0
    %91 = vmatprep.subr.mxu0 0.0
    %92 = vmatpush1.msra.mxu0 0.0
    %93 = vmatprep.subr.mxu0 0.0
    %94 = vmatpush1.msra.mxu0 0.0
    %95 = vmatprep.subr.mxu0 0.0
    %96 = vmatpush1.msra.mxu0 0.0
    %97 = vmatprep.subr.mxu0 0.0
    %98 = vmatpush1.msra.mxu0 0.0
    %99 = vmatprep.subr.mxu0 0.0
    %100 = vmatpush1.msra.mxu0 0.0
    %101 = vmatprep.subr.mxu0 0.0
    %102 = vmatpush1.msra.mxu0 0.0
    %103 = vmatprep.subr.mxu0 0.0
    %104 = vmatpush1.msra.mxu0 0.0
    %105 = vmatprep.subr.mxu0 0.0
    %106 = vmatpush1.msra.mxu0 0.0
    %107 = vmatprep.subr.mxu0 0.0
    %108 = vmatpush1.msra.mxu0 0.0
    %109 = vmatprep.subr.mxu0 0.0
    %110 = vmatpush1.msra.mxu0 0.0
    %111 = vmatprep.subr.mxu0 0.0
    %112 = vmatpush1.msra.mxu0 0.0
    %113 = vmatprep.subr.mxu0 0.0
    %114 = vmatpush1.msra.mxu0 0.0
    %115 = vmatprep.subr.mxu0 0.0
    %116 = vmatpush1.msra.mxu0 0.0
    %117 = vmatprep.subr.mxu0 0.0
    %118 = vmatpush1.msra.mxu0 0.0
    %119 = vmatprep.subr.mxu0 0.0
    %120 = vmatpush1.msra.mxu0 0.0
    %121 = vmatprep.subr.mxu0 0.0
    %122 = vmatpush1.msra.mxu0 0.0
    %123 = vmatprep.subr.mxu0 0.0
    %124 = vmatpush1.msra.mxu0 0.0
    %125 = vmatprep.subr.mxu0 0.0
    %126 = vmatpush1.msra.mxu0 0.0
    %127 = vmatprep.subr.mxu0 0.0
    %128 = vmatpush1.msra.mxu0 0.0
    %129 = vmatprep.subr.mxu0 0.0
    %130 = vmatpush1.msra.mxu0 0.0
    %131 = vmatprep.subr.mxu0 0.0
    %132 = vmatpush1.msra.mxu0 0.0
    %133 = vmatprep.subr.mxu0 0.0
    %134 = vmatpush1.msra.mxu0 0.0
    %135 = vmatprep.subr.mxu0 0.0
    %136 = vmatpush1.msra.mxu0 0.0
    %137 = vmatprep.mubr.f32.mxu0 0.0
    %138 = vmatmul.mubr.f32.gmra.mrb[0].mxu0 %v68
    %v139 = vpop.f32.mrb[0].mxu0
    %v140 = vadd.f32 %v64, %v139
    %v141 = vpop.f32.mrb[0].mxu0
    %142 = vmatprep.mubr.f32.mxu0 0.0
    %143 = vmatmul.mubr.f32.gmra.mrb[0].mxu0 %v71
    %v144 = vpop.f32.mrb[0].mxu0
    %v145 = vadd.f32 %v64, %v144
    %v146 = vpop.f32.mrb[0].mxu0
    %147 = vdwg.mxu0
    %v148 = vmul.f32 %v140, 0.01
    %v149 = vmul.f32 %v145, 0.01
    %v150 = vmax.f32 %v140, %v148
    %v151 = vmax.f32 %v145, %v149
    %v152 = vld [vmem:[#allocation2] sm:$0xf]
    %v153 = vld [vmem:[#allocation2 + $0x4] sm:$0xf]
    %v154 = vld [vmem:[#allocation2 + $0x8] sm:$0xf]
    %v155 = vld [vmem:[#allocation2 + $0xc] sm:$0xf]
    %v156 = vld [vmem:[#allocation2 + $0x10] sm:$0xf]
    %v157 = vld [vmem:[#allocation2 + $0x14] sm:$0xf]
    %v158 = vld [vmem:[#allocation2 + $0x18] sm:$0xf]
    %v159 = vld [vmem:[#allocation2 + $0x1c] sm:$0xf]
    %v160 = vld [vmem:[#allocation2 + $0x20] sm:$0xf]
    %v161 = vld [vmem:[#allocation2 + $0x24] sm:$0xf]
    %v162 = vld [vmem:[#allocation2 + $0x28] sm:$0xf]
    %v163 = vld [vmem:[#allocation2 + $0x2c] sm:$0xf]
    %v164 = vld [vmem:[#allocation2 + $0x30] sm:$0xf]
    %v165 = vld [vmem:[#allocation2 + $0x34] sm:$0xf]
    %v166 = vld [vmem:[#allocation2 + $0x38] sm:$0xf]
    %v167 = vld [vmem:[#allocation2 + $0x3c] sm:$0xf]
    %v168 = vpack.c.bf16 %v151, %v150
    %s169 = scalar_lea.vmem %s7, 1
    %v170 = vld [vmem:[%s169] sm:$0x1]
    %v172 = vlaneseq
    %v173 = vshrl.u32 %v172, 7
    %v174 = vsub.s32 0, %v173
    %v175 = vrot.slane %v170, %v174
    %v193 = vunpack.c.l.b16 %v152
    %v194 = vunpack.c.l.b16 %v153
    %v195 = vunpack.c.l.b16 %v154
    %v196 = vunpack.c.l.b16 %v155
    %v197 = vunpack.c.l.b16 %v156
    %v198 = vunpack.c.l.b16 %v157
    %v199 = vunpack.c.l.b16 %v158
    %v200 = vunpack.c.l.b16 %v159
    %v201 = vunpack.c.l.b16 %v160
    %v202 = vunpack.c.l.b16 %v161
    %v203 = vunpack.c.l.b16 %v162
    %v204 = vunpack.c.l.b16 %v163
    %v205 = vunpack.c.l.b16 %v164
    %v206 = vunpack.c.l.b16 %v165
    %v207 = vunpack.c.l.b16 %v166
    %v208 = vunpack.c.l.b16 %v167
    %v209 = vpack.c.b16 %v194, %v193
    %v210 = vpack.c.b16 %v196, %v195
    %v211 = vpack.c.b16 %v198, %v197
    %v212 = vpack.c.b16 %v200, %v199
    %v213 = vpack.c.b16 %v202, %v201
    %v214 = vpack.c.b16 %v204, %v203
    %v215 = vpack.c.b16 %v206, %v205
    %v216 = vpack.c.b16 %v208, %v207
    %225 = vmatprep.subr.bf16.mxu0 0
    %226 = vmatpush1.bf16.msra.mxu0 %v209
    %227 = vmatprep.subr.bf16.mxu0 0
    %228 = vmatpush1.bf16.msra.mxu0 %v210
    %229 = vmatprep.subr.bf16.mxu0 0
    %230 = vmatpush1.bf16.msra.mxu0 %v211
    %231 = vmatprep.subr.bf16.mxu0 0
    %232 = vmatpush1.bf16.msra.mxu0 %v212
    %233 = vmatprep.subr.bf16.mxu0 0
    %234 = vmatpush1.bf16.msra.mxu0 %v213
    %235 = vmatprep.subr.bf16.mxu0 0
    %236 = vmatpush1.bf16.msra.mxu0 %v214
    %237 = vmatprep.subr.bf16.mxu0 0
    %238 = vmatpush1.bf16.msra.mxu0 %v215
    %239 = vmatprep.subr.bf16.mxu0 0
    %240 = vmatpush1.bf16.msra.mxu0 %v216
    %241 = vmatprep.subr.bf16.mxu0 0
    %242 = vmatpush1.bf16.msra.mxu0 0
    %243 = vmatprep.subr.bf16.mxu0 0
    %244 = vmatpush1.bf16.msra.mxu0 0
    %245 = vmatprep.subr.bf16.mxu0 0
    %246 = vmatpush1.bf16.msra.mxu0 0
    %247 = vmatprep.subr.bf16.mxu0 0
    %248 = vmatpush1.bf16.msra.mxu0 0
    %249 = vmatprep.subr.bf16.mxu0 0
    %250 = vmatpush1.bf16.msra.mxu0 0
    %251 = vmatprep.subr.bf16.mxu0 0
    %252 = vmatpush1.bf16.msra.mxu0 0
    %253 = vmatprep.subr.bf16.mxu0 0
    %254 = vmatpush1.bf16.msra.mxu0 0
    %255 = vmatprep.subr.bf16.mxu0 0
    %256 = vmatpush1.bf16.msra.mxu0 0
    %257 = vmatprep.mubr.bf16.mxu0 0
    %258 = vmatmul.mubr.bf16.gmra.mrb[0].mxu0 %v168
    %v259 = vpop.f32.mrb[0].mxu0
    %v260 = vadd.f32 %v175, %v259
    %v261 = vpop.f32.mrb[0].mxu0
    %v262 = vpop.f32.mrb[0].mxu0
    %v263 = vadd.f32 %v175, %v262
    %v264 = vpop.f32.mrb[0].mxu0
    %265 = vdwg.mxu0
    %v266 = vmul.f32 %v260, 0.01
    %v267 = vmul.f32 %v263, 0.01
    %v268 = vmax.f32 %v260, %v266
    %v269 = vmax.f32 %v263, %v267
    %s270 = scalar_lea.vmem [#allocation2], 64
    %v271 = vld [vmem:[%s270] sm:$0xf]
    %v272 = vld [vmem:[%s270 + $0x4] sm:$0xf]
    %v273 = vld [vmem:[%s270 + $0x8] sm:$0xf]
    %v274 = vld [vmem:[%s270 + $0xc] sm:$0xf]
    %v275 = vld [vmem:[%s270 + $0x10] sm:$0xf]
    %v276 = vld [vmem:[%s270 + $0x14] sm:$0xf]
    %v277 = vld [vmem:[%s270 + $0x18] sm:$0xf]
    %v278 = vld [vmem:[%s270 + $0x1c] sm:$0xf]
    %v279 = vld [vmem:[%s270 + $0x20] sm:$0xf]
    %v280 = vld [vmem:[%s270 + $0x24] sm:$0xf]
    %v281 = vld [vmem:[%s270 + $0x28] sm:$0xf]
    %v282 = vld [vmem:[%s270 + $0x2c] sm:$0xf]
    %v283 = vld [vmem:[%s270 + $0x30] sm:$0xf]
    %v284 = vld [vmem:[%s270 + $0x34] sm:$0xf]
    %v285 = vld [vmem:[%s270 + $0x38] sm:$0xf]
    %v286 = vld [vmem:[%s270 + $0x3c] sm:$0xf]
    %v287 = vpack.c.bf16 %v269, %v268
    %s288 = scalar_lea.vmem %s7, 2
    %v289 = vld [vmem:[%s288] sm:$0x1]
    %v291 = vlaneseq
    %v292 = vshrl.u32 %v291, 7
    %v293 = vsub.s32 0, %v292
    %v294 = vrot.slane %v289, %v293
    %v312 = vunpack.c.l.b16 %v271
    %v313 = vunpack.c.l.b16 %v272
    %v314 = vunpack.c.l.b16 %v273
    %v315 = vunpack.c.l.b16 %v274
    %v316 = vunpack.c.l.b16 %v275
    %v317 = vunpack.c.l.b16 %v276
    %v318 = vunpack.c.l.b16 %v277
    %v319 = vunpack.c.l.b16 %v278
    %v320 = vunpack.c.l.b16 %v279
    %v321 = vunpack.c.l.b16 %v280
    %v322 = vunpack.c.l.b16 %v281
    %v323 = vunpack.c.l.b16 %v282
    %v324 = vunpack.c.l.b16 %v283
    %v325 = vunpack.c.l.b16 %v284
    %v326 = vunpack.c.l.b16 %v285
    %v327 = vunpack.c.l.b16 %v286
    %v328 = vpack.c.b16 %v313, %v312
    %v329 = vpack.c.b16 %v315, %v314
    %v330 = vpack.c.b16 %v317, %v316
    %v331 = vpack.c.b16 %v319, %v318
    %v332 = vpack.c.b16 %v321, %v320
    %v333 = vpack.c.b16 %v323, %v322
    %v334 = vpack.c.b16 %v325, %v324
    %v335 = vpack.c.b16 %v327, %v326
    %344 = vmatprep.subr.bf16.mxu0 0
    %345 = vmatpush1.bf16.msra.mxu0 %v328
    %346 = vmatprep.subr.bf16.mxu0 0
    %347 = vmatpush1.bf16.msra.mxu0 %v329
    %348 = vmatprep.subr.bf16.mxu0 0
    %349 = vmatpush1.bf16.msra.mxu0 %v330
    %350 = vmatprep.subr.bf16.mxu0 0
    %351 = vmatpush1.bf16.msra.mxu0 %v331
    %352 = vmatprep.subr.bf16.mxu0 0
    %353 = vmatpush1.bf16.msra.mxu0 %v332
    %354 = vmatprep.subr.bf16.mxu0 0
    %355 = vmatpush1.bf16.msra.mxu0 %v333
    %356 = vmatprep.subr.bf16.mxu0 0
    %357 = vmatpush1.bf16.msra.mxu0 %v334
    %358 = vmatprep.subr.bf16.mxu0 0
    %359 = vmatpush1.bf16.msra.mxu0 %v335
    %360 = vmatprep.subr.bf16.mxu0 0
    %361 = vmatpush1.bf16.msra.mxu0 0
    %362 = vmatprep.subr.bf16.mxu0 0
    %363 = vmatpush1.bf16.msra.mxu0 0
    %364 = vmatprep.subr.bf16.mxu0 0
    %365 = vmatpush1.bf16.msra.mxu0 0
    %366 = vmatprep.subr.bf16.mxu0 0
    %367 = vmatpush1.bf16.msra.mxu0 0
    %368 = vmatprep.subr.bf16.mxu0 0
    %369 = vmatpush1.bf16.msra.mxu0 0
    %370 = vmatprep.subr.bf16.mxu0 0
    %371 = vmatpush1.bf16.msra.mxu0 0
    %372 = vmatprep.subr.bf16.mxu0 0
    %373 = vmatpush1.bf16.msra.mxu0 0
    %374 = vmatprep.subr.bf16.mxu0 0
    %375 = vmatpush1.bf16.msra.mxu0 0
    %376 = vmatprep.mubr.bf16.mxu0 0
    %377 = vmatmul.mubr.bf16.gmra.mrb[0].mxu0 %v287
    %v378 = vpop.f32.mrb[0].mxu0
    %v379 = vadd.f32 %v294, %v378
    %v380 = vpop.f32.mrb[0].mxu0
    %v381 = vpop.f32.mrb[0].mxu0
    %v382 = vadd.f32 %v294, %v381
    %v383 = vpop.f32.mrb[0].mxu0
    %384 = vdwg.mxu0
    %v385 = vld [vmem:[%s5] sm:$0xf]
    %v386 = vld [vmem:[%s5 + $0x4] sm:$0xf]
    %v387 = vld [vmem:[%s5 + $0x8] sm:$0xf]
    %v388 = vld [vmem:[%s5 + $0xc] sm:$0xf]
    %v389 = vld [vmem:[%s5 + $0x10] sm:$0xf]
    %v390 = vld [vmem:[%s5 + $0x14] sm:$0xf]
    %v391 = vld [vmem:[%s5 + $0x18] sm:$0xf]
    %v392 = vld [vmem:[%s5 + $0x1c] sm:$0xf]
    %v393 = vld [vmem:[%s5 + $0x20] sm:$0xf]
    %v394 = vld [vmem:[%s5 + $0x24] sm:$0xf]
    %v395 = vld [vmem:[%s5 + $0x28] sm:$0xf]
    %v396 = vld [vmem:[%s5 + $0x2c] sm:$0xf]
    %v397 = vld [vmem:[%s5 + $0x30] sm:$0xf]
    %v398 = vld [vmem:[%s5 + $0x34] sm:$0xf]
    %v399 = vld [vmem:[%s5 + $0x38] sm:$0xf]
    %v400 = vld [vmem:[%s5 + $0x3c] sm:$0xf]
    %v401 = vpack.c.bf16 %v382, %v379
    %v402 = vld [vmem:[%s8] sm:$0x1]
    %v404 = vlaneseq
    %v405 = vshrl.u32 %v404, 7
    %v406 = vsub.s32 0, %v405
    %v407 = vrot.slane %v402, %v406
    %v425 = vunpack.c.l.b16 %v385
    %v426 = vunpack.c.l.b16 %v386
    %v427 = vunpack.c.l.b16 %v387
    %v428 = vunpack.c.l.b16 %v388
    %v429 = vunpack.c.l.b16 %v389
    %v430 = vunpack.c.l.b16 %v390
    %v431 = vunpack.c.l.b16 %v391
    %v432 = vunpack.c.l.b16 %v392
    %v433 = vunpack.c.l.b16 %v393
    %v434 = vunpack.c.l.b16 %v394
    %v435 = vunpack.c.l.b16 %v395
    %v436 = vunpack.c.l.b16 %v396
    %v437 = vunpack.c.l.b16 %v397
    %v438 = vunpack.c.l.b16 %v398
    %v439 = vunpack.c.l.b16 %v399
    %v440 = vunpack.c.l.b16 %v400
    %v441 = vpack.c.b16 %v426, %v425
    %v442 = vpack.c.b16 %v428, %v427
    %v443 = vpack.c.b16 %v430, %v429
    %v444 = vpack.c.b16 %v432, %v431
    %v445 = vpack.c.b16 %v434, %v433
    %v446 = vpack.c.b16 %v436, %v435
    %v447 = vpack.c.b16 %v438, %v437
    %v448 = vpack.c.b16 %v440, %v439
    %457 = vmatprep.subr.bf16.mxu0 0
    %458 = vmatpush1.bf16.msra.mxu0 %v441
    %459 = vmatprep.subr.bf16.mxu0 0
    %460 = vmatpush1.bf16.msra.mxu0 %v442
    %461 = vmatprep.subr.bf16.mxu0 0
    %462 = vmatpush1.bf16.msra.mxu0 %v443
    %463 = vmatprep.subr.bf16.mxu0 0
    %464 = vmatpush1.bf16.msra.mxu0 %v444
    %465 = vmatprep.subr.bf16.mxu0 0
    %466 = vmatpush1.bf16.msra.mxu0 %v445
    %467 = vmatprep.subr.bf16.mxu0 0
    %468 = vmatpush1.bf16.msra.mxu0 %v446
    %469 = vmatprep.subr.bf16.mxu0 0
    %470 = vmatpush1.bf16.msra.mxu0 %v447
    %471 = vmatprep.subr.bf16.mxu0 0
    %472 = vmatpush1.bf16.msra.mxu0 %v448
    %473 = vmatprep.subr.bf16.mxu0 0
    %474 = vmatpush1.bf16.msra.mxu0 0
    %475 = vmatprep.subr.bf16.mxu0 0
    %476 = vmatpush1.bf16.msra.mxu0 0
    %477 = vmatprep.subr.bf16.mxu0 0
    %478 = vmatpush1.bf16.msra.mxu0 0
    %479 = vmatprep.subr.bf16.mxu0 0
    %480 = vmatpush1.bf16.msra.mxu0 0
    %481 = vmatprep.subr.bf16.mxu0 0
    %482 = vmatpush1.bf16.msra.mxu0 0
    %483 = vmatprep.subr.bf16.mxu0 0
    %484 = vmatpush1.bf16.msra.mxu0 0
    %485 = vmatprep.subr.bf16.mxu0 0
    %486 = vmatpush1.bf16.msra.mxu0 0
    %487 = vmatprep.subr.bf16.mxu0 0
    %488 = vmatpush1.bf16.msra.mxu0 0
    %489 = vmatprep.mubr.bf16.mxu0 0
    %490 = vmatmul.mubr.bf16.gmra.mrb[0].mxu0 %v401
    %v491 = vpop.f32.mrb[0].mxu0
    %v492 = vadd.f32 %v407, %v491
    %v493 = vpop.f32.mrb[0].mxu0
    %v494 = vpop.f32.mrb[0].mxu0
    %v495 = vadd.f32 %v407, %v494
    %v496 = vpop.f32.mrb[0].mxu0
    %497 = vdwg.mxu0
    %s498 = scalar_lea.vmem %s5, 64
    %v499 = vld [vmem:[%s498] sm:$0xf]
    %v500 = vld [vmem:[%s498 + $0x4] sm:$0xf]
    %v501 = vld [vmem:[%s498 + $0x8] sm:$0xf]
    %v502 = vld [vmem:[%s498 + $0xc] sm:$0xf]
    %v503 = vld [vmem:[%s498 + $0x10] sm:$0xf]
    %v504 = vld [vmem:[%s498 + $0x14] sm:$0xf]
    %v505 = vld [vmem:[%s498 + $0x18] sm:$0xf]
    %v506 = vld [vmem:[%s498 + $0x1c] sm:$0xf]
    %v507 = vld [vmem:[%s498 + $0x20] sm:$0xf]
    %v508 = vld [vmem:[%s498 + $0x24] sm:$0xf]
    %v509 = vld [vmem:[%s498 + $0x28] sm:$0xf]
    %v510 = vld [vmem:[%s498 + $0x2c] sm:$0xf]
    %v511 = vld [vmem:[%s498 + $0x30] sm:$0xf]
    %v512 = vld [vmem:[%s498 + $0x34] sm:$0xf]
    %v513 = vld [vmem:[%s498 + $0x38] sm:$0xf]
    %v514 = vld [vmem:[%s498 + $0x3c] sm:$0xf]
    %s515 = scalar_lea.vmem %s8, 1
    %v516 = vld [vmem:[%s515] sm:$0x1]
    %v518 = vlaneseq
    %v519 = vshrl.u32 %v518, 7
    %v520 = vsub.s32 0, %v519
    %v521 = vrot.slane %v516, %v520
    %v539 = vunpack.c.l.b16 %v499
    %v540 = vunpack.c.l.b16 %v500
    %v541 = vunpack.c.l.b16 %v501
    %v542 = vunpack.c.l.b16 %v502
    %v543 = vunpack.c.l.b16 %v503
    %v544 = vunpack.c.l.b16 %v504
    %v545 = vunpack.c.l.b16 %v505
    %v546 = vunpack.c.l.b16 %v506
    %v547 = vunpack.c.l.b16 %v507
    %v548 = vunpack.c.l.b16 %v508
    %v549 = vunpack.c.l.b16 %v509
    %v550 = vunpack.c.l.b16 %v510
    %v551 = vunpack.c.l.b16 %v511
    %v552 = vunpack.c.l.b16 %v512
    %v553 = vunpack.c.l.b16 %v513
    %v554 = vunpack.c.l.b16 %v514
    %v555 = vpack.c.b16 %v540, %v539
    %v556 = vpack.c.b16 %v542, %v541
    %v557 = vpack.c.b16 %v544, %v543
    %v558 = vpack.c.b16 %v546, %v545
    %v559 = vpack.c.b16 %v548, %v547
    %v560 = vpack.c.b16 %v550, %v549
    %v561 = vpack.c.b16 %v552, %v551
    %v562 = vpack.c.b16 %v554, %v553
    %571 = vmatprep.subr.bf16.mxu0 0
    %572 = vmatpush1.bf16.msra.mxu0 %v555
    %573 = vmatprep.subr.bf16.mxu0 0
    %574 = vmatpush1.bf16.msra.mxu0 %v556
    %575 = vmatprep.subr.bf16.mxu0 0
    %576 = vmatpush1.bf16.msra.mxu0 %v557
    %577 = vmatprep.subr.bf16.mxu0 0
    %578 = vmatpush1.bf16.msra.mxu0 %v558
    %579 = vmatprep.subr.bf16.mxu0 0
    %580 = vmatpush1.bf16.msra.mxu0 %v559
    %581 = vmatprep.subr.bf16.mxu0 0
    %582 = vmatpush1.bf16.msra.mxu0 %v560
    %583 = vmatprep.subr.bf16.mxu0 0
    %584 = vmatpush1.bf16.msra.mxu0 %v561
    %585 = vmatprep.subr.bf16.mxu0 0
    %586 = vmatpush1.bf16.msra.mxu0 %v562
    %587 = vmatprep.subr.bf16.mxu0 0
    %588 = vmatpush1.bf16.msra.mxu0 0
    %589 = vmatprep.subr.bf16.mxu0 0
    %590 = vmatpush1.bf16.msra.mxu0 0
    %591 = vmatprep.subr.bf16.mxu0 0
    %592 = vmatpush1.bf16.msra.mxu0 0
    %593 = vmatprep.subr.bf16.mxu0 0
    %594 = vmatpush1.bf16.msra.mxu0 0
    %595 = vmatprep.subr.bf16.mxu0 0
    %596 = vmatpush1.bf16.msra.mxu0 0
    %597 = vmatprep.subr.bf16.mxu0 0
    %598 = vmatpush1.bf16.msra.mxu0 0
    %599 = vmatprep.subr.bf16.mxu0 0
    %600 = vmatpush1.bf16.msra.mxu0 0
    %601 = vmatprep.subr.bf16.mxu0 0
    %602 = vmatpush1.bf16.msra.mxu0 0
    %603 = vmatprep.mubr.bf16.mxu0 0
    %604 = vmatmul.mubr.bf16.gmra.mrb[0].mxu0 %v401
    %v605 = vpop.f32.mrb[0].mxu0
    %v606 = vadd.f32 %v521, %v605
    %v607 = vpop.f32.mrb[0].mxu0
    %v608 = vpop.f32.mrb[0].mxu0
    %v609 = vadd.f32 %v521, %v608
    %v610 = vpop.f32.mrb[0].mxu0
    %611 = vdwg.mxu0
    %v612 = vld [vmem:[%s1] sm:$0xff]
    %v613 = vld [vmem:[%s1 + $0x8] sm:$0xff]
    %v614 = vmul.f32 %v606, 0.5
    %v615 = vmul.f32 %v609, 0.5
    %v616 = vmul.f32 %v614, 1.442695
    %v617 = vpow.pop %v616
    %v618 = vmul.f32 %v615, 1.442695
    %v619 = vpow.pop %v618
    %v620 = vmul.f32 %v612, %v617
    %v621 = vmul.f32 %v613, %v619
    %v622 = vadd.f32 %v492, %v620
    %v623 = vadd.f32 %v495, %v621
    %v624 = vld [vmem:[%s4] sm:$0xf]
    %v625 = vld [vmem:[%s4 + $0x4] sm:$0xf]
    %v626 = vpack.c.bf16 %v623, %v622
    %s627 = scalar_lea.vmem %s7, 3
    %v628 = vld [vmem:[%s627] sm:$0x1]
    %v630 = vlaneseq
    %v631 = vshrl.u32 %v630, 7
    %v632 = vsub.s32 0, %v631
    %v633 = vrot.slane %v628, %v632
    %v637 = vunpack.c.l.b16 %v624
    %v638 = vunpack.c.l.b16 %v625
    %v639 = vpack.c.b16 %v638, %v637
    %v642 = vsel %vm66, %v626, 0
    %644 = vmatprep.subr.bf16.mxu0 0
    %645 = vmatpush1.bf16.msra.mxu0 %v639
    %646 = vmatprep.subr.bf16.mxu0 0
    %647 = vmatpush1.bf16.msra.mxu0 0
    %648 = vmatprep.subr.bf16.mxu0 0
    %649 = vmatpush1.bf16.msra.mxu0 0
    %650 = vmatprep.subr.bf16.mxu0 0
    %651 = vmatpush1.bf16.msra.mxu0 0
    %652 = vmatprep.subr.bf16.mxu0 0
    %653 = vmatpush1.bf16.msra.mxu0 0
    %654 = vmatprep.subr.bf16.mxu0 0
    %655 = vmatpush1.bf16.msra.mxu0 0
    %656 = vmatprep.subr.bf16.mxu0 0
    %657 = vmatpush1.bf16.msra.mxu0 0
    %658 = vmatprep.subr.bf16.mxu0 0
    %659 = vmatpush1.bf16.msra.mxu0 0
    %660 = vmatprep.subr.bf16.mxu0 0
    %661 = vmatpush1.bf16.msra.mxu0 0
    %662 = vmatprep.subr.bf16.mxu0 0
    %663 = vmatpush1.bf16.msra.mxu0 0
    %664 = vmatprep.subr.bf16.mxu0 0
    %665 = vmatpush1.bf16.msra.mxu0 0
    %666 = vmatprep.subr.bf16.mxu0 0
    %667 = vmatpush1.bf16.msra.mxu0 0
    %668 = vmatprep.subr.bf16.mxu0 0
    %669 = vmatpush1.bf16.msra.mxu0 0
    %670 = vmatprep.subr.bf16.mxu0 0
    %671 = vmatpush1.bf16.msra.mxu0 0
    %672 = vmatprep.subr.bf16.mxu0 0
    %673 = vmatpush1.bf16.msra.mxu0 0
    %674 = vmatprep.subr.bf16.mxu0 0
    %675 = vmatpush1.bf16.msra.mxu0 0
    %676 = vmatprep.mubr.bf16.mxu0 0
    %677 = vmatmul.mubr.bf16.gmra.mrb[0].mxu0 %v642
    %v678 = vpop.f32.mrb[0].mxu0
    %v679 = vadd.f32 %v633, %v678
    %v680 = vpop.f32.mrb[0].mxu0
    %v681 = vpop.f32.mrb[0].mxu0
    %v682 = vadd.f32 %v633, %v681
    %v683 = vpop.f32.mrb[0].mxu0
    %684 = vdwg.mxu0
    %v685 = vmul.f32 %v679, 0.01
    %v686 = vmul.f32 %v682, 0.01
    %v687 = vmax.f32 %v679, %v685
    %v688 = vmax.f32 %v682, %v686
    %s689 = scalar_lea.vmem [#allocation2], 128
    %v690 = vld [vmem:[%s689] sm:$0xf]
    %v691 = vld [vmem:[%s689 + $0x4] sm:$0xf]
    %v692 = vld [vmem:[%s689 + $0x8] sm:$0xf]
    %v693 = vld [vmem:[%s689 + $0xc] sm:$0xf]
    %v694 = vld [vmem:[%s689 + $0x10] sm:$0xf]
    %v695 = vld [vmem:[%s689 + $0x14] sm:$0xf]
    %v696 = vld [vmem:[%s689 + $0x18] sm:$0xf]
    %v697 = vld [vmem:[%s689 + $0x1c] sm:$0xf]
    %v698 = vld [vmem:[%s689 + $0x20] sm:$0xf]
    %v699 = vld [vmem:[%s689 + $0x24] sm:$0xf]
    %v700 = vld [vmem:[%s689 + $0x28] sm:$0xf]
    %v701 = vld [vmem:[%s689 + $0x2c] sm:$0xf]
    %v702 = vld [vmem:[%s689 + $0x30] sm:$0xf]
    %v703 = vld [vmem:[%s689 + $0x34] sm:$0xf]
    %v704 = vld [vmem:[%s689 + $0x38] sm:$0xf]
    %v705 = vld [vmem:[%s689 + $0x3c] sm:$0xf]
    %v706 = vpack.c.bf16 %v688, %v687
    %s707 = scalar_lea.vmem %s7, 4
    %v708 = vld [vmem:[%s707] sm:$0x1]
    %v710 = vlaneseq
    %v711 = vshrl.u32 %v710, 7
    %v712 = vsub.s32 0, %v711
    %v713 = vrot.slane %v708, %v712
    %v731 = vunpack.c.l.b16 %v690
    %v732 = vunpack.c.l.b16 %v691
    %v733 = vunpack.c.l.b16 %v692
    %v734 = vunpack.c.l.b16 %v693
    %v735 = vunpack.c.l.b16 %v694
    %v736 = vunpack.c.l.b16 %v695
    %v737 = vunpack.c.l.b16 %v696
    %v738 = vunpack.c.l.b16 %v697
    %v739 = vunpack.c.l.b16 %v698
    %v740 = vunpack.c.l.b16 %v699
    %v741 = vunpack.c.l.b16 %v700
    %v742 = vunpack.c.l.b16 %v701
    %v743 = vunpack.c.l.b16 %v702
    %v744 = vunpack.c.l.b16 %v703
    %v745 = vunpack.c.l.b16 %v704
    %v746 = vunpack.c.l.b16 %v705
    %v747 = vpack.c.b16 %v732, %v731
    %v748 = vpack.c.b16 %v734, %v733
    %v749 = vpack.c.b16 %v736, %v735
    %v750 = vpack.c.b16 %v738, %v737
    %v751 = vpack.c.b16 %v740, %v739
    %v752 = vpack.c.b16 %v742, %v741
    %v753 = vpack.c.b16 %v744, %v743
    %v754 = vpack.c.b16 %v746, %v745
    %763 = vmatprep.subr.bf16.mxu0 0
    %764 = vmatpush1.bf16.msra.mxu0 %v747
    %765 = vmatprep.subr.bf16.mxu0 0
    %766 = vmatpush1.bf16.msra.mxu0 %v748
    %767 = vmatprep.subr.bf16.mxu0 0
    %768 = vmatpush1.bf16.msra.mxu0 %v749
    %769 = vmatprep.subr.bf16.mxu0 0
    %770 = vmatpush1.bf16.msra.mxu0 %v750
    %771 = vmatprep.subr.bf16.mxu0 0
    %772 = vmatpush1.bf16.msra.mxu0 %v751
    %773 = vmatprep.subr.bf16.mxu0 0
    %774 = vmatpush1.bf16.msra.mxu0 %v752
    %775 = vmatprep.subr.bf16.mxu0 0
    %776 = vmatpush1.bf16.msra.mxu0 %v753
    %777 = vmatprep.subr.bf16.mxu0 0
    %778 = vmatpush1.bf16.msra.mxu0 %v754
    %779 = vmatprep.subr.bf16.mxu0 0
    %780 = vmatpush1.bf16.msra.mxu0 0
    %781 = vmatprep.subr.bf16.mxu0 0
    %782 = vmatpush1.bf16.msra.mxu0 0
    %783 = vmatprep.subr.bf16.mxu0 0
    %784 = vmatpush1.bf16.msra.mxu0 0
    %785 = vmatprep.subr.bf16.mxu0 0
    %786 = vmatpush1.bf16.msra.mxu0 0
    %787 = vmatprep.subr.bf16.mxu0 0
    %788 = vmatpush1.bf16.msra.mxu0 0
    %789 = vmatprep.subr.bf16.mxu0 0
    %790 = vmatpush1.bf16.msra.mxu0 0
    %791 = vmatprep.subr.bf16.mxu0 0
    %792 = vmatpush1.bf16.msra.mxu0 0
    %793 = vmatprep.subr.bf16.mxu0 0
    %794 = vmatpush1.bf16.msra.mxu0 0
    %795 = vmatprep.mubr.bf16.mxu0 0
    %796 = vmatmul.mubr.bf16.gmra.mrb[0].mxu0 %v706
    %v797 = vpop.f32.mrb[0].mxu0
    %v798 = vadd.f32 %v713, %v797
    %v799 = vpop.f32.mrb[0].mxu0
    %v800 = vpop.f32.mrb[0].mxu0
    %v801 = vadd.f32 %v713, %v800
    %v802 = vpop.f32.mrb[0].mxu0
    %803 = vdwg.mxu0
    %v804 = vmul.f32 %v798, 0.01
    %v805 = vmul.f32 %v801, 0.01
    %v806 = vmax.f32 %v798, %v804
    %v807 = vmax.f32 %v801, %v805
    %v808 = vld [vmem:[%s6] sm:$0xf]
    %v809 = vld [vmem:[%s6 + $0x4] sm:$0xf]
    %v810 = vld [vmem:[%s6 + $0x8] sm:$0xf]
    %v811 = vld [vmem:[%s6 + $0xc] sm:$0xf]
    %v812 = vld [vmem:[%s6 + $0x10] sm:$0xf]
    %v813 = vld [vmem:[%s6 + $0x14] sm:$0xf]
    %v814 = vld [vmem:[%s6 + $0x18] sm:$0xf]
    %v815 = vld [vmem:[%s6 + $0x1c] sm:$0xf]
    %v816 = vld [vmem:[%s6 + $0x20] sm:$0xf]
    %v817 = vld [vmem:[%s6 + $0x24] sm:$0xf]
    %v818 = vld [vmem:[%s6 + $0x28] sm:$0xf]
    %v819 = vld [vmem:[%s6 + $0x2c] sm:$0xf]
    %v820 = vld [vmem:[%s6 + $0x30] sm:$0xf]
    %v821 = vld [vmem:[%s6 + $0x34] sm:$0xf]
    %v822 = vld [vmem:[%s6 + $0x38] sm:$0xf]
    %v823 = vld [vmem:[%s6 + $0x3c] sm:$0xf]
    %v824 = vpack.c.bf16 %v807, %v806
    %v825 = vld [vmem:[%s9] sm:$0x1]
    %v827 = vlaneseq
    %v828 = vshrl.u32 %v827, 7
    %v829 = vsub.s32 0, %v828
    %v830 = vrot.slane %v825, %v829
    %v848 = vunpack.c.l.b16 %v808
    %v849 = vunpack.c.l.b16 %v809
    %v850 = vunpack.c.l.b16 %v810
    %v851 = vunpack.c.l.b16 %v811
    %v852 = vunpack.c.l.b16 %v812
    %v853 = vunpack.c.l.b16 %v813
    %v854 = vunpack.c.l.b16 %v814
    %v855 = vunpack.c.l.b16 %v815
    %v856 = vunpack.c.l.b16 %v816
    %v857 = vunpack.c.l.b16 %v817
    %v858 = vunpack.c.l.b16 %v818
    %v859 = vunpack.c.l.b16 %v819
    %v860 = vunpack.c.l.b16 %v820
    %v861 = vunpack.c.l.b16 %v821
    %v862 = vunpack.c.l.b16 %v822
    %v863 = vunpack.c.l.b16 %v823
    %v864 = vpack.c.b16 %v849, %v848
    %v865 = vpack.c.b16 %v851, %v850
    %v866 = vpack.c.b16 %v853, %v852
    %v867 = vpack.c.b16 %v855, %v854
    %v868 = vpack.c.b16 %v857, %v856
    %v869 = vpack.c.b16 %v859, %v858
    %v870 = vpack.c.b16 %v861, %v860
    %v871 = vpack.c.b16 %v863, %v862
    %880 = vmatprep.subr.bf16.mxu0 0
    %881 = vmatpush1.bf16.msra.mxu0 %v864
    %882 = vmatprep.subr.bf16.mxu0 0
    %883 = vmatpush1.bf16.msra.mxu0 %v865
    %884 = vmatprep.subr.bf16.mxu0 0
    %885 = vmatpush1.bf16.msra.mxu0 %v866
    %886 = vmatprep.subr.bf16.mxu0 0
    %887 = vmatpush1.bf16.msra.mxu0 %v867
    %888 = vmatprep.subr.bf16.mxu0 0
    %889 = vmatpush1.bf16.msra.mxu0 %v868
    %890 = vmatprep.subr.bf16.mxu0 0
    %891 = vmatpush1.bf16.msra.mxu0 %v869
    %892 = vmatprep.subr.bf16.mxu0 0
    %893 = vmatpush1.bf16.msra.mxu0 %v870
    %894 = vmatprep.subr.bf16.mxu0 0
    %895 = vmatpush1.bf16.msra.mxu0 %v871
    %896 = vmatprep.subr.bf16.mxu0 0
    %897 = vmatpush1.bf16.msra.mxu0 0
    %898 = vmatprep.subr.bf16.mxu0 0
    %899 = vmatpush1.bf16.msra.mxu0 0
    %900 = vmatprep.subr.bf16.mxu0 0
    %901 = vmatpush1.bf16.msra.mxu0 0
    %902 = vmatprep.subr.bf16.mxu0 0
    %903 = vmatpush1.bf16.msra.mxu0 0
    %904 = vmatprep.subr.bf16.mxu0 0
    %905 = vmatpush1.bf16.msra.mxu0 0
    %906 = vmatprep.subr.bf16.mxu0 0
    %907 = vmatpush1.bf16.msra.mxu0 0
    %908 = vmatprep.subr.bf16.mxu0 0
    %909 = vmatpush1.bf16.msra.mxu0 0
    %910 = vmatprep.subr.bf16.mxu0 0
    %911 = vmatpush1.bf16.msra.mxu0 0
    %912 = vmatprep.mubr.bf16.mxu0 0
    %913 = vmatmul.mubr.bf16.gmra.mrb[0].mxu0 %v824
    %v914 = vpop.f32.mrb[0].mxu0
    %v915 = vadd.f32 %v830, %v914
    %v916 = vpop.f32.mrb[0].mxu0
    %v917 = vpop.f32.mrb[0].mxu0
    %v918 = vadd.f32 %v830, %v917
    %v919 = vpop.f32.mrb[0].mxu0
    %920 = vdwg.mxu0
    %921 = vst [vmem:[#allocation5] sm:$0xff] %v915
    %922 = vst [vmem:[#allocation5 + $0x8] sm:$0xff] %v918
    %923 = vst.msk [vmem:[#allocation6] sm:$0xff] %vm66, %v492
    %924 = vst.msk [vmem:[#allocation6 + $0x8] sm:$0xff] %vm66, %v495
    %925 = vst.msk [vmem:[#allocation8] sm:$0xff] %vm66, %v606
    %926 = vst.msk [vmem:[#allocation8 + $0x8] sm:$0xff] %vm66, %v609
    // Predicated region
    $region46: #{tpu_custom_call.1} parent=1 // pred_check
      _
    $region47: #{tpu_custom_call.1} parent=1 // pred_check_branch
      %928 = sbr.rel (0) target = $region49
    $region48: #{tpu_custom_call.1} parent=1 // pred_region
      %s930 = ssub.s32 256, 256
      %931 = vsyncadd [#allocation4], %s930
      %s932 = sshll.u32 [#allocation5], 4
      %s933 = int_to_ptr.vmem [resolvable:$true] %s932
      %938 = dma.vmem_to_hbm [thread:$0]  %s933, 256, %s10, [#allocation4], 128, 128, 8
    $region49: #{tpu_custom_call.1} parent=1 // pred_fallthru
      _
    // Predicated region
    $region50: #{tpu_custom_call.1} parent=1 // pred_check
      _
    $region51: #{tpu_custom_call.1} parent=1 // pred_check_branch
      %940 = sbr.rel (0) target = $region53
    $region52: #{tpu_custom_call.1} parent=1 // pred_region
      %s942 = ssub.s32 256, 256
      %943 = vsyncadd [#allocation7], %s942
      %s944 = sshll.u32 [#allocation6], 4
      %s945 = int_to_ptr.vmem [resolvable:$true] %s944
      %950 = dma.vmem_to_hbm [thread:$0]  %s945, 256, %s11, [#allocation7], 128, 128, 8
    $region53: #{tpu_custom_call.1} parent=1 // pred_fallthru
      _
    // Predicated region
    $region54: #{tpu_custom_call.1} parent=1 // pred_check
      _
    $region55: #{tpu_custom_call.1} parent=1 // pred_check_branch
      %952 = sbr.rel (0) target = $region57
    $region56: #{tpu_custom_call.1} parent=1 // pred_region
      %s954 = ssub.s32 256, 256
      %955 = vsyncadd [#allocation7], %s954
      %s956 = sshll.u32 [#allocation8], 4
      %s957 = int_to_ptr.vmem [resolvable:$true] %s956
      %962 = dma.vmem_to_hbm [thread:$0]  %s957, 256, %s12, [#allocation7], 128, 128, 8
    $region57: #{tpu_custom_call.1} parent=1 // pred_fallthru
      _
    // Predicated region
    $region58: #{tpu_custom_call.1} parent=1 // pred_check
      _
    $region59: #{tpu_custom_call.1} parent=1 // pred_check_branch
      %964 = sbr.rel (0) target = $region61
    $region60: #{tpu_custom_call.1} parent=1 // pred_region
      %965 = dma.done [#allocation4], 256
    $region61: #{tpu_custom_call.1} parent=1 // pred_fallthru
      _
    // Predicated region
    $region62: #{tpu_custom_call.1} parent=1 // pred_check
      _
    $region63: #{tpu_custom_call.1} parent=1 // pred_check_branch
      %967 = sbr.rel (0) target = $region65
    $region64: #{tpu_custom_call.1} parent=1 // pred_region
      %968 = dma.done [#allocation7], 256
    $region65: #{tpu_custom_call.1} parent=1 // pred_fallthru
      _
    // Predicated region
    $region66: #{tpu_custom_call.1} parent=1 // pred_check
      _
    $region67: #{tpu_custom_call.1} parent=1 // pred_check_branch
      %970 = sbr.rel (0) target = $region69
    $region68: #{tpu_custom_call.1} parent=1 // pred_region
      %971 = dma.done [#allocation7], 256
    $region69: #{tpu_custom_call.1} parent=1 // pred_fallthru
      _
    %972 = vsyncpa [#allocation3], 1
    %973 = vsyncpa [#allocation4], 1
    %974 = vsyncpa [#allocation7], 1

</llo_original>
